<compile_context>
chip_gen: v7x
topology: tpu7x:2x2x1
jax: 0.10.0
libtpu: 0.0.40
codegen_flags: <defaults>
</compile_context>

<pallas_src>
import functools

import jax
import jax.numpy as jnp
from jax import lax
from jax.experimental import pallas as pl
from jax.experimental.pallas import tpu as pltpu

TILE_N = 512                  # big row tiles: mem-bound kernel, amortize per-step overhead
RESIDENT_BUDGET = 12 * 2**20  # keep x VMEM-resident across both phases when it fits
                              # (conservative vs v5e 16MiB / v7x 32MiB default scoped VMEM)


# ---------------------------------------------------------------------------
# Fused kernel: phase 0 = per-batch mean + linear2 (+ W1b half pre-applied),
#               phase 1 = linear1 + folded BN + ReLU.
# ---------------------------------------------------------------------------
def transition_up_kernel(x_ref, seg_col_ref, seg_row_ref, w2t_ref, b2_ref,
                         w1at_ref, w1bt_ref, shift_ref, y_ref,
                         acc_ref, h_ref, x_vmem=None, *, tile_n, b_pad):
    ph = pl.program_id(0)
    i = pl.program_id(1)
    nt = pl.num_programs(1)
    row0 = pl.multiple_of(i * tile_n, tile_n)

    @pl.when(ph == 0)
    def _accumulate():
        @pl.when(i == 0)
        def _():
            acc_ref[...] = jnp.zeros_like(acc_ref)

        x = x_ref[...]
        if x_vmem is not None:                       # keep x resident for phase 1
            x_vmem[pl.ds(row0, tile_n), :] = x

        # (b_pad, tile_n) 0/1 batch-membership matrix built in-register
        # (point indices compared as f32 -> exact for N < 2**24).
        cidx = (lax.broadcasted_iota(jnp.int32, (b_pad, tile_n), 1)
                + i * tile_n).astype(jnp.float32)
        sel = jnp.logical_and(cidx >= seg_col_ref[:, 0:1],
                              cidx < seg_col_ref[:, 1:2])
        acc_ref[...] += jnp.dot(sel.astype(jnp.float32), x,
                                preferred_element_type=jnp.float32)

        @pl.when(i == nt - 1)
        def _finalize():
            mean = acc_ref[...] * seg_col_ref[:, 2:3]            # (b_pad, C)
            g = jnp.dot(mean, w2t_ref[...],
                        preferred_element_type=jnp.float32) + b2_ref[...]
            g = jnp.maximum(g, 0.0)                              # linear2 + ReLU
            # Pre-apply the concat-half of linear1 (BN-folded) to g so phase 1
            # only needs a cheap (tile_n, b_pad) x (b_pad, C) gather-matmul.
            h_ref[...] = jnp.dot(g, w1bt_ref[...],
                                 preferred_element_type=jnp.float32)

    @pl.when(ph == 1)
    def _apply():
        if x_vmem is not None:
            x = x_vmem[pl.ds(row0, tile_n), :]
        else:
            x = x_ref[...]
        ridx = (lax.broadcasted_iota(jnp.int32, (tile_n, b_pad), 0)
                + i * tile_n).astype(jnp.float32)
        onehot = jnp.logical_and(ridx >= seg_row_ref[0:1, :],
                                 ridx < seg_row_ref[1:2, :]).astype(jnp.float32)
        z = jnp.dot(x, w1at_ref[...], preferred_element_type=jnp.float32)
        z = z + jnp.dot(onehot, h_ref[...], preferred_element_type=jnp.float32)
        y_ref[...] = jnp.maximum(z + shift_ref[...], 0.0).astype(y_ref.dtype)


# ---------------------------------------------------------------------------
# Wrapper
# ---------------------------------------------------------------------------
def transition_up_forward(p, x, o, params):
    """TransitionUp.forward, pxo2 is None branch.  p (coords) is unused."""
    del p
    N, C = x.shape
    B = int(o.shape[0])
    b_pad = max(8, ((B + 7) // 8) * 8)          # no hard batch cap

    n_pad = ((N + TILE_N - 1) // TILE_N) * TILE_N
    num_tiles = n_pad // TILE_N
    x = x.astype(jnp.float32)
    x_p = x if n_pad == N else jnp.pad(x, ((0, n_pad - N), (0, 0)))

    # --- tiny segment tables (resident in VMEM; replaces the old (N,B) one-hot) ---
    ends = o.astype(jnp.float32)
    starts = jnp.concatenate([jnp.zeros((1,), jnp.float32), ends[:-1]])
    counts = ends - starts
    invcnt = jnp.where(counts > 0, 1.0 / jnp.maximum(counts, 1.0), 0.0)  # empty-batch guard
    seg_col = jnp.zeros((b_pad, 3), jnp.float32)
    seg_col = seg_col.at[:B, 0].set(starts).at[:B, 1].set(ends).at[:B, 2].set(invcnt)
    seg_row = jnp.zeros((2, b_pad), jnp.float32)
    seg_row = seg_row.at[0, :B].set(starts).at[1, :B].set(ends)

    # --- fold bias + eval-mode BatchNorm1d into linear1; pre-transpose weights ---
    w1 = params["w1"].astype(jnp.float32)       # (C, 2C)
    b1 = params["b1"].astype(jnp.float32)
    w2 = params["w2"].astype(jnp.float32)       # (C, C)
    b2 = params["b2"].astype(jnp.float32)
    eps = 1e-5
    bn_s = params["bn_gamma"] / jnp.sqrt(params["bn_var"] + eps)
    w1at = w1[:, :C].T * bn_s[None, :]          # (C_in, C_out), BN scale folded in
    w1bt = w1[:, C:].T * bn_s[None, :]          # (C_in, C_out), BN scale folded in
    shift = ((b1 - params["bn_mean"]) * bn_s + params["bn_beta"])[None, :]
    w2t = w2.T                                  # (C, C)
    b2r = b2[None, :]                           # (1, C)

    resident = (n_pad * C * 4) <= RESIDENT_BUDGET
    full = lambda ph, i: (0, 0)
    if resident:
        # phase 1 reads x from the VMEM-resident copy -> keep the HBM block index
        # parked at the last tile so no extra x DMAs are issued in phase 1.
        x_map = lambda ph, i: ((1 - ph) * i + ph * (num_tiles - 1), 0)
        scratch = [pltpu.VMEM((b_pad, C), jnp.float32),    # acc (per-batch sums)
                   pltpu.VMEM((b_pad, C), jnp.float32),    # h = relu(linear2(mean)) @ W1bt
                   pltpu.VMEM((n_pad, C), jnp.float32)]    # resident copy of x
    else:
        # TODO(synk): for very large N, x is streamed from HBM once per phase.
        x_map = lambda ph, i: (i, 0)
        scratch = [pltpu.VMEM((b_pad, C), jnp.float32),
                   pltpu.VMEM((b_pad, C), jnp.float32)]

    kernel = functools.partial(transition_up_kernel, tile_n=TILE_N, b_pad=b_pad)
    y_p = pl.pallas_call(
        kernel,
        out_shape=jax.ShapeDtypeStruct((n_pad, C), jnp.float32),
        grid_spec=pltpu.PrefetchScalarGridSpec(
            num_scalar_prefetch=0,
            grid=(2, num_tiles),                           # (phase, row-tile)
            in_specs=[
                pl.BlockSpec((TILE_N, C), x_map),          # x row tiles
                pl.BlockSpec((b_pad, 3), full),            # [start, end, 1/cnt] per batch
                pl.BlockSpec((2, b_pad), full),            # [start; end] row layout
                pl.BlockSpec((C, C), full),                # W2^T
                pl.BlockSpec((1, C), full),                # b2
                pl.BlockSpec((C, C), full),                # (W1a^T) * bn_scale
                pl.BlockSpec((C, C), full),                # (W1b^T) * bn_scale
                pl.BlockSpec((1, C), full),                # folded bias/BN shift
            ],
            # phase 0 keeps the output block parked (no garbage writebacks);
            # phase 1 walks the tiles and writes each block exactly once.
            out_specs=pl.BlockSpec((TILE_N, C), lambda ph, i: (ph * i, 0)),
            scratch_shapes=scratch,
        ),
        # Both axes are sequential: phase carries scratch state, tiles carry the
        # phase-0 reduction.  TODO(synk): v7x 2nd TensorCore idles; a core-split
        # of the phase-0 reduction would need partial accumulators + combine.
        compiler_params=pltpu.CompilerParams(
            dimension_semantics=("arbitrary", "arbitrary")),
    )(x_p, seg_col, seg_row, w2t, b2r, w1at, w1bt, shift)

    return y_p[:N]


# ---------------------------------------------------------------------------
# Pure-JAX reference (for correctness check)
# ---------------------------------------------------------------------------
def reference_forward(x, o, params):
    N, _ = x.shape
    B = o.shape[0]
    eps = 1e-5
    batch_ids = jnp.searchsorted(o, jnp.arange(N, dtype=o.dtype), side="right")
    sums = jax.ops.segment_sum(x, batch_ids, num_segments=B)
    counts = jnp.diff(o, prepend=jnp.zeros((1,), o.dtype)).astype(jnp.float32)
    means = sums / counts[:, None]
    g = jnp.maximum(means @ params["w2"].T + params["b2"], 0.0)
    cat = jnp.concatenate([x, g[batch_ids]], axis=1)
    y = cat @ params["w1"].T + params["b1"]
    y = (y - params["bn_mean"]) / jnp.sqrt(params["bn_var"] + eps)
    y = y * params["bn_gamma"] + params["bn_beta"]
    return jnp.maximum(y, 0.0)


if __name__ == "__main__":
    C = 32                          # in_planes (NetSeg width)
    counts = [300, 250, 350]        # 3 ragged batches -> N = 900 (spans 2 row tiles)
    o = jnp.cumsum(jnp.array(counts, dtype=jnp.int32))
    N = int(o[-1])

    key = jax.random.PRNGKey(0)
    kp, kx, k1, k2, k3, k4, k5, k6 = jax.random.split(key, 8)

    p = jax.random.normal(kp, (N, 3), jnp.float32)   # coords (unused by this branch)
    x = jax.random.normal(kx, (N, C), jnp.float32)

    params = {
        # linear1: Linear(2C -> C) + BatchNorm1d(C) + ReLU
        "w1": jax.random.normal(k1, (C, 2 * C), jnp.float32) * 0.1,
        "b1": jax.random.normal(k2, (C,), jnp.float32) * 0.1,
        "bn_gamma": 1.0 + 0.1 * jax.random.normal(k5, (C,), jnp.float32),
        "bn_beta": 0.1 * jax.random.normal(k6, (C,), jnp.float32),
        "bn_mean": 0.05 * jax.random.normal(k3, (C,), jnp.float32),
        "bn_var": jnp.ones((C,), jnp.float32),
        # linear2: Linear(C -> C) + ReLU
        "w2": jax.random.normal(k3, (C, C), jnp.float32) * 0.1,
        "b2": jax.random.normal(k4, (C,), jnp.float32) * 0.1,
    }

    y = jax.block_until_ready(transition_up_forward(p, x, o, params))
    y_ref = reference_forward(x, o, params)

    assert y.shape == (N, C), y.shape
    assert jnp.allclose(y, y_ref, rtol=1e-4, atol=1e-4), \
        float(jnp.max(jnp.abs(y - y_ref)))

    print("KERNEL_OK")
</pallas_src>

<mosaic_0001>
module attributes {stable_mosaic.version = 11 : i64} {
  func.func @transition_up_kernel(%arg0: i32, %arg1: i32, %arg2: memref<512x32xf32, #tpu.memory_space<vmem>>, %arg3: memref<8x3xf32, #tpu.memory_space<vmem>>, %arg4: memref<2x8xf32, #tpu.memory_space<vmem>>, %arg5: memref<32x32xf32, #tpu.memory_space<vmem>>, %arg6: memref<1x32xf32, #tpu.memory_space<vmem>>, %arg7: memref<32x32xf32, #tpu.memory_space<vmem>>, %arg8: memref<32x32xf32, #tpu.memory_space<vmem>>, %arg9: memref<1x32xf32, #tpu.memory_space<vmem>>, %arg10: memref<512x32xf32, #tpu.memory_space<vmem>>, %arg11: memref<8x32xf32, #tpu.memory_space<vmem>>, %arg12: memref<8x32xf32, #tpu.memory_space<vmem>>, %arg13: memref<1024x32xf32, #tpu.memory_space<vmem>>) attributes {dimension_semantics = [#tpu.dimension_semantics<arbitrary>, #tpu.dimension_semantics<arbitrary>], iteration_bounds = array<i64: 2, 2>, scalar_prefetch = 0 : i64, scratch_operands = 3 : i64, tpu.core_type = #tpu.core_type<tc>, window_params = [{transform_indices = @transform_0, window_bounds = array<i64: 512, 32>}, {pipeline_mode = #tpu.pipeline_mode<synchronous>, transform_indices = @transform_1, window_bounds = array<i64: 8, 3>}, {pipeline_mode = #tpu.pipeline_mode<synchronous>, transform_indices = @transform_2, window_bounds = array<i64: 2, 8>}, {pipeline_mode = #tpu.pipeline_mode<synchronous>, transform_indices = @transform_3, window_bounds = array<i64: 32, 32>}, {pipeline_mode = #tpu.pipeline_mode<synchronous>, transform_indices = @transform_4, window_bounds = array<i64: 1, 32>}, {pipeline_mode = #tpu.pipeline_mode<synchronous>, transform_indices = @transform_5, window_bounds = array<i64: 32, 32>}, {pipeline_mode = #tpu.pipeline_mode<synchronous>, transform_indices = @transform_6, window_bounds = array<i64: 32, 32>}, {pipeline_mode = #tpu.pipeline_mode<synchronous>, transform_indices = @transform_7, window_bounds = array<i64: 1, 32>}, {transform_indices = @transform_8, window_bounds = array<i64: 512, 32>}]} {
    %c512_i32 = arith.constant 512 : i32
    %0 = arith.muli %arg1, %c512_i32 : i32
    %1 = tpu.assume_multiple %0, 512 : i32
    %c0_i32 = arith.constant 0 : i32
    %2 = arith.cmpi eq, %arg0, %c0_i32 : i32
    %3 = arith.extui %2 : i1 to i32
    %c0_i32_0 = arith.constant 0 : i32
    %4 = arith.cmpi ne, %3, %c0_i32_0 : i32
    scf.if %4 {
      %c0_i32_2 = arith.constant 0 : i32
      %8 = arith.cmpi eq, %arg1, %c0_i32_2 : i32
      %9 = arith.extui %8 : i1 to i32
      %c0_i32_3 = arith.constant 0 : i32
      %10 = arith.cmpi ne, %9, %c0_i32_3 : i32
      scf.if %10 {
        %cst_16 = arith.constant 0.000000e+00 : f32
        %35 = vector.broadcast %cst_16 : f32 to vector<8x32xf32>
        %c0_17 = arith.constant 0 : index
        %c0_18 = arith.constant 0 : index
        %36 = vector.load %arg11[%c0_17, %c0_18] : memref<8x32xf32, #tpu.memory_space<vmem>>, vector<8x32xf32>
        tpu.vector_store %arg11[%c0_17, %c0_18], %35 {strides = array<i32>} : memref<8x32xf32, #tpu.memory_space<vmem>>, vector<8x32xf32>,
      } else {
      }
      %c0 = arith.constant 0 : index
      %c0_4 = arith.constant 0 : index
      %11 = vector.load %arg2[%c0, %c0_4] : memref<512x32xf32, #tpu.memory_space<vmem>>, vector<512x32xf32>
      %12 = arith.index_cast %1 : i32 to index
      %c0_5 = arith.constant 0 : index
      %13 = vector.load %arg13[%12, %c0_5] : memref<1024x32xf32, #tpu.memory_space<vmem>>, vector<512x32xf32>
      tpu.vector_store %arg13[%12, %c0_5], %11 {strides = array<i32>} : memref<1024x32xf32, #tpu.memory_space<vmem>>, vector<512x32xf32>,
      %14 = tpu.iota {dimensions = array<i32: 1>} : vector<8x512xi32>
      %c512_i32_6 = arith.constant 512 : i32
      %15 = arith.muli %arg1, %c512_i32_6 : i32
      %16 = vector.broadcast %15 : i32 to vector<8x512xi32>
      %17 = arith.addi %14, %16 : vector<8x512xi32>
      %18 = arith.sitofp %17 : vector<8x512xi32> to vector<8x512xf32>
      %c0_7 = arith.constant 0 : index
      %c0_8 = arith.constant 0 : index
      %19 = vector.load %arg3[%c0_7, %c0_8] : memref<8x3xf32, #tpu.memory_space<vmem>>, vector<8x1xf32>
      %20 = vector.broadcast %19 : vector<8x1xf32> to vector<8x512xf32>
      %21 = arith.cmpf oge, %18, %20 : vector<8x512xf32>
      %c0_9 = arith.constant 0 : index
      %c1 = arith.constant 1 : index
      %22 = vector.load %arg3[%c0_9, %c1] : memref<8x3xf32, #tpu.memory_space<vmem>>, vector<8x1xf32>
      %23 = vector.broadcast %22 : vector<8x1xf32> to vector<8x512xf32>
      %24 = arith.cmpf olt, %18, %23 : vector<8x512xf32>
      %25 = arith.andi %21, %24 : vector<8x512xi1>
      %c0_10 = arith.constant 0 : index
      %c0_11 = arith.constant 0 : index
      %26 = vector.load %arg11[%c0_10, %c0_11] : memref<8x32xf32, #tpu.memory_space<vmem>>, vector<8x32xf32>
      %27 = arith.extui %25 : vector<8x512xi1> to vector<8x512xi32>
      %28 = arith.sitofp %27 : vector<8x512xi32> to vector<8x512xf32>
      %cst = arith.constant dense<0.000000e+00> : vector<8x32xf32>
      %29 = tpu.matmul %28, %11, %cst {dimension_numbers = #tpu.dot_dimension_numbers<[1], [0], [0], [1], [0, 0, 1, 1], [], []>} : vector<8x512xf32>, vector<512x32xf32>, vector<8x32xf32> -> vector<8x32xf32>
      %30 = arith.addf %26, %29 : vector<8x32xf32>
      %c0_12 = arith.constant 0 : index
      %c0_13 = arith.constant 0 : index
      %31 = vector.load %arg11[%c0_12, %c0_13] : memref<8x32xf32, #tpu.memory_space<vmem>>, vector<8x32xf32>
      tpu.vector_store %arg11[%c0_12, %c0_13], %30 {strides = array<i32>} : memref<8x32xf32, #tpu.memory_space<vmem>>, vector<8x32xf32>,
      %c1_i32_14 = arith.constant 1 : i32
      %32 = arith.cmpi eq, %arg1, %c1_i32_14 : i32
      %33 = arith.extui %32 : i1 to i32
      %c0_i32_15 = arith.constant 0 : i32
      %34 = arith.cmpi ne, %33, %c0_i32_15 : i32
      scf.if %34 {
        %c0_16 = arith.constant 0 : index
        %c0_17 = arith.constant 0 : index
        %35 = vector.load %arg11[%c0_16, %c0_17] : memref<8x32xf32, #tpu.memory_space<vmem>>, vector<8x32xf32>
        %c0_18 = arith.constant 0 : index
        %c2 = arith.constant 2 : index
        %36 = vector.load %arg3[%c0_18, %c2] : memref<8x3xf32, #tpu.memory_space<vmem>>, vector<8x1xf32>
        %37 = vector.broadcast %36 : vector<8x1xf32> to vector<8x32xf32>
        %38 = arith.mulf %35, %37 : vector<8x32xf32>
        %c0_19 = arith.constant 0 : index
        %c0_20 = arith.constant 0 : index
        %39 = vector.load %arg5[%c0_19, %c0_20] : memref<32x32xf32, #tpu.memory_space<vmem>>, vector<32x32xf32>
        %cst_21 = arith.constant dense<0.000000e+00> : vector<8x32xf32>
        %40 = tpu.matmul %38, %39, %cst_21 {dimension_numbers = #tpu.dot_dimension_numbers<[1], [0], [0], [1], [0, 0, 1, 1], [], []>} : vector<8x32xf32>, vector<32x32xf32>, vector<8x32xf32> -> vector<8x32xf32>
        %c0_22 = arith.constant 0 : index
        %c0_23 = arith.constant 0 : index
        %41 = vector.load %arg6[%c0_22, %c0_23] : memref<1x32xf32, #tpu.memory_space<vmem>>, vector<1x32xf32>
        %42 = vector.broadcast %41 : vector<1x32xf32> to vector<8x32xf32>
        %43 = arith.addf %40, %42 : vector<8x32xf32>
        %cst_24 = arith.constant 0.000000e+00 : f32
        %44 = vector.broadcast %cst_24 : f32 to vector<8x32xf32>
        %45 = arith.maximumf %43, %44 : vector<8x32xf32>
        %c0_25 = arith.constant 0 : index
        %c0_26 = arith.constant 0 : index
        %46 = vector.load %arg8[%c0_25, %c0_26] : memref<32x32xf32, #tpu.memory_space<vmem>>, vector<32x32xf32>
        %cst_27 = arith.constant dense<0.000000e+00> : vector<8x32xf32>
        %47 = tpu.matmul %45, %46, %cst_27 {dimension_numbers = #tpu.dot_dimension_numbers<[1], [0], [0], [1], [0, 0, 1, 1], [], []>} : vector<8x32xf32>, vector<32x32xf32>, vector<8x32xf32> -> vector<8x32xf32>
        %c0_28 = arith.constant 0 : index
        %c0_29 = arith.constant 0 : index
        %48 = vector.load %arg12[%c0_28, %c0_29] : memref<8x32xf32, #tpu.memory_space<vmem>>, vector<8x32xf32>
        tpu.vector_store %arg12[%c0_28, %c0_29], %47 {strides = array<i32>} : memref<8x32xf32, #tpu.memory_space<vmem>>, vector<8x32xf32>,
      } else {
      }
    } else {
    }
    %c1_i32 = arith.constant 1 : i32
    %5 = arith.cmpi eq, %arg0, %c1_i32 : i32
    %6 = arith.extui %5 : i1 to i32
    %c0_i32_1 = arith.constant 0 : i32
    %7 = arith.cmpi ne, %6, %c0_i32_1 : i32
    scf.if %7 {
      %8 = arith.index_cast %1 : i32 to index
      %c0 = arith.constant 0 : index
      %9 = vector.load %arg13[%8, %c0] : memref<1024x32xf32, #tpu.memory_space<vmem>>, vector<512x32xf32>
      %10 = tpu.iota {dimensions = array<i32: 0>} : vector<512x8xi32>
      %c512_i32_2 = arith.constant 512 : i32
      %11 = arith.muli %arg1, %c512_i32_2 : i32
      %12 = vector.broadcast %11 : i32 to vector<512x8xi32>
      %13 = arith.addi %10, %12 : vector<512x8xi32>
      %14 = arith.sitofp %13 : vector<512x8xi32> to vector<512x8xf32>
      %c0_3 = arith.constant 0 : index
      %c0_4 = arith.constant 0 : index
      %15 = vector.load %arg4[%c0_3, %c0_4] : memref<2x8xf32, #tpu.memory_space<vmem>>, vector<1x8xf32>
      %16 = vector.broadcast %15 : vector<1x8xf32> to vector<512x8xf32>
      %17 = arith.cmpf oge, %14, %16 : vector<512x8xf32>
      %c1 = arith.constant 1 : index
      %c0_5 = arith.constant 0 : index
      %18 = vector.load %arg4[%c1, %c0_5] : memref<2x8xf32, #tpu.memory_space<vmem>>, vector<1x8xf32>
      %19 = vector.broadcast %18 : vector<1x8xf32> to vector<512x8xf32>
      %20 = arith.cmpf olt, %14, %19 : vector<512x8xf32>
      %21 = arith.andi %17, %20 : vector<512x8xi1>
      %22 = arith.extui %21 : vector<512x8xi1> to vector<512x8xi32>
      %23 = arith.sitofp %22 : vector<512x8xi32> to vector<512x8xf32>
      %c0_6 = arith.constant 0 : index
      %c0_7 = arith.constant 0 : index
      %24 = vector.load %arg7[%c0_6, %c0_7] : memref<32x32xf32, #tpu.memory_space<vmem>>, vector<32x32xf32>
      %cst = arith.constant dense<0.000000e+00> : vector<512x32xf32>
      %25 = tpu.matmul %9, %24, %cst {dimension_numbers = #tpu.dot_dimension_numbers<[1], [0], [0], [1], [0, 0, 1, 1], [], []>} : vector<512x32xf32>, vector<32x32xf32>, vector<512x32xf32> -> vector<512x32xf32>
      %c0_8 = arith.constant 0 : index
      %c0_9 = arith.constant 0 : index
      %26 = vector.load %arg12[%c0_8, %c0_9] : memref<8x32xf32, #tpu.memory_space<vmem>>, vector<8x32xf32>
      %cst_10 = arith.constant dense<0.000000e+00> : vector<512x32xf32>
      %27 = tpu.matmul %23, %26, %cst_10 {dimension_numbers = #tpu.dot_dimension_numbers<[1], [0], [0], [1], [0, 0, 1, 1], [], []>} : vector<512x8xf32>, vector<8x32xf32>, vector<512x32xf32> -> vector<512x32xf32>
      %28 = arith.addf %25, %27 : vector<512x32xf32>
      %c0_11 = arith.constant 0 : index
      %c0_12 = arith.constant 0 : index
      %29 = vector.load %arg9[%c0_11, %c0_12] : memref<1x32xf32, #tpu.memory_space<vmem>>, vector<1x32xf32>
      %30 = vector.broadcast %29 : vector<1x32xf32> to vector<512x32xf32>
      %31 = arith.addf %28, %30 : vector<512x32xf32>
      %cst_13 = arith.constant 0.000000e+00 : f32
      %32 = vector.broadcast %cst_13 : f32 to vector<512x32xf32>
      %33 = arith.maximumf %31, %32 : vector<512x32xf32>
      %c0_14 = arith.constant 0 : index
      %c0_15 = arith.constant 0 : index
      %34 = vector.load %arg10[%c0_14, %c0_15] : memref<512x32xf32, #tpu.memory_space<vmem>>, vector<512x32xf32>
      tpu.vector_store %arg10[%c0_14, %c0_15], %33 {strides = array<i32>} : memref<512x32xf32, #tpu.memory_space<vmem>>, vector<512x32xf32>,
    } else {
    }
    return
  }
  func.func @transform_0(%arg0: i32, %arg1: i32) -> (i32, i32) {
    %c1_i32 = arith.constant 1 : i32
    %0 = arith.subi %c1_i32, %arg0 : i32
    %1 = arith.muli %0, %arg1 : i32
    %c1_i32_0 = arith.constant 1 : i32
    %2 = arith.muli %arg0, %c1_i32_0 : i32
    %3 = arith.addi %1, %2 : i32
    %c0_i32 = arith.constant 0 : i32
    %c0_i32_1 = arith.constant 0 : i32
    return %3, %c0_i32 : i32, i32
  }
  func.func @transform_1(%arg0: i32, %arg1: i32) -> (i32, i32) {
    %c0_i32 = arith.constant 0 : i32
    %c0_i32_0 = arith.constant 0 : i32
    %c0_i32_1 = arith.constant 0 : i32
    return %c0_i32, %c0_i32_0 : i32, i32
  }
  func.func @transform_2(%arg0: i32, %arg1: i32) -> (i32, i32) {
    %c0_i32 = arith.constant 0 : i32
    %c0_i32_0 = arith.constant 0 : i32
    %c0_i32_1 = arith.constant 0 : i32
    return %c0_i32, %c0_i32_0 : i32, i32
  }
  func.func @transform_3(%arg0: i32, %arg1: i32) -> (i32, i32) {
    %c0_i32 = arith.constant 0 : i32
    %c0_i32_0 = arith.constant 0 : i32
    %c0_i32_1 = arith.constant 0 : i32
    return %c0_i32, %c0_i32_0 : i32, i32
  }
  func.func @transform_4(%arg0: i32, %arg1: i32) -> (i32, i32) {
    %c0_i32 = arith.constant 0 : i32
    %c0_i32_0 = arith.constant 0 : i32
    %c0_i32_1 = arith.constant 0 : i32
    return %c0_i32, %c0_i32_0 : i32, i32
  }
  func.func @transform_5(%arg0: i32, %arg1: i32) -> (i32, i32) {
    %c0_i32 = arith.constant 0 : i32
    %c0_i32_0 = arith.constant 0 : i32
    %c0_i32_1 = arith.constant 0 : i32
    return %c0_i32, %c0_i32_0 : i32, i32
  }
  func.func @transform_6(%arg0: i32, %arg1: i32) -> (i32, i32) {
    %c0_i32 = arith.constant 0 : i32
    %c0_i32_0 = arith.constant 0 : i32
    %c0_i32_1 = arith.constant 0 : i32
    return %c0_i32, %c0_i32_0 : i32, i32
  }
  func.func @transform_7(%arg0: i32, %arg1: i32) -> (i32, i32) {
    %c0_i32 = arith.constant 0 : i32
    %c0_i32_0 = arith.constant 0 : i32
    %c0_i32_1 = arith.constant 0 : i32
    return %c0_i32, %c0_i32_0 : i32, i32
  }
  func.func @transform_8(%arg0: i32, %arg1: i32) -> (i32, i32) {
    %0 = arith.muli %arg0, %arg1 : i32
    %c0_i32 = arith.constant 0 : i32
    %c0_i32_0 = arith.constant 0 : i32
    return %0, %c0_i32 : i32, i32
  }
}

</mosaic_0001>

<llo_original>
// kernel: tpu_custom_call.1
$region0: #{tpu_custom_call.1}
  #allocation0 [shape = 'u32[]', space=smem, size = 0x4, offset = 0x4, fixed_abs, tag = 'smem constant byte address 0x4 - core index']
  #allocation1 [shape = 'u32[144,128]{1,0:T(1,128)}', space=vmem, size = 0x12000, scoped, tag = 'internal scratch']
  #allocation2 [shape = 'f32[8,32]{1,0:T(8,128)}', space=vmem, size = 0x1000, scoped, tag = 'scratch operand']
  #allocation3 [shape = 'f32[8,32]{1,0:T(8,128)}', space=vmem, size = 0x1000, scoped, tag = 'scratch operand']
  #allocation4 [shape = 'f32[1024,32]{1,0:T(8,128)}', space=vmem, size = 0x80000, scoped, tag = 'scratch operand']
  %s0 = inlined_call_operand.vmem [shape: f32[1024,32], index: 0, kind: input, shape index: {}]
  %s1 = inlined_call_operand.vmem [shape: f32[8,3], index: 1, kind: input, shape index: {}]
  %s2 = inlined_call_operand.vmem [shape: f32[2,8], index: 2, kind: input, shape index: {}]
  %s3 = inlined_call_operand.vmem [shape: f32[32,32], index: 3, kind: input, shape index: {}]
  %s4 = inlined_call_operand.vmem [shape: f32[1,32], index: 4, kind: input, shape index: {}]
  %s5 = inlined_call_operand.vmem [shape: f32[32,32], index: 5, kind: input, shape index: {}]
  %s6 = inlined_call_operand.vmem [shape: f32[32,32], index: 6, kind: input, shape index: {}]
  %s7 = inlined_call_operand.vmem [shape: f32[1,32], index: 7, kind: input, shape index: {}]
  %s8 = inlined_call_operand.vmem [shape: f32[1024,32], index: 8, kind: output, shape index: {}]
  %s9 = sld [smem:[#allocation0]]
  $region81: #{tpu_custom_call.1} parent=0
    _
  %s11 = ssub.s32 1, %s9
  %s12 = scalar_select 0, %s11, %s9
  loop: start=0, step=1, limit=6
  $region2: #{tpu_custom_call.1} parent=0 // loop_pre_header
    _
  $region3: #{tpu_custom_call.1} parent=0 // loop_header
    %s14 = sphi 0, %s18
    %p15 = scmp.ge.s32.totalorder %s14, 6
    %s21 = sphi 0, %s33
    %s22 = sphi 0, %s29
    %s23 = sphi 0, %s21
    %s24 = sphi 0, %s22
    %s25 = sphi 0, %s23
    %s26 = sphi 0, %s24
    %s42 = sphi 0, %s44
    %s45 = sphi 0, %s42
    %s46 = sphi 0, %s45
    %s62 = sphi 0, %s46
    %s66 = sphi 0, %s66
    %s68 = sphi 0, %s66
    %s69 = sphi 0, %s68
    %s83 = sphi 0, %s69
    %s87 = sphi 0, %s87
    %s89 = sphi 0, %s87
    %s90 = sphi 0, %s89
    %s104 = sphi 0, %s90
    %s108 = sphi 0, %s108
    %s110 = sphi 0, %s108
    %s111 = sphi 0, %s110
    %s125 = sphi 0, %s111
    %s129 = sphi 0, %s129
    %s131 = sphi 0, %s129
    %s132 = sphi 0, %s131
    %s146 = sphi 0, %s132
    %s150 = sphi 0, %s150
    %s152 = sphi 0, %s150
    %s153 = sphi 0, %s152
    %s167 = sphi 0, %s153
    %s171 = sphi 0, %s171
    %s173 = sphi 0, %s171
    %s174 = sphi 0, %s173
    %s188 = sphi 0, %s174
    %s192 = sphi 0, %s192
    %s194 = sphi 0, %s192
    %s195 = sphi 0, %s194
    %s209 = sphi 0, %s195
    %s217 = sphi 0, %s219
    %s220 = sphi 0, %s217
    %s221 = sphi 0, %s220
    %s237 = sphi 0, %s221
  $region4: #{tpu_custom_call.1} parent=0 // loop_header_branch
    %17 = sbr.rel (%p15) target = $region8
  $region5: #{tpu_custom_call.1} parent=0 // loop_body
    %s19 = ssub.s32 %s14, 1
    %s20 = ssub.s32 %s14, 2
    %s27 = sadd.s32 1, %s22
    %p28 = scmp.ge.s32.totalorder %s27, 2
    %s29 = scalar_select %p28, 0, %s27
    %s30 = sadd.s32 1, %s21
    %s31 = scalar_select %p28, %s30, %s21
    %p32 = scmp.ge.s32.totalorder %s31, 2
    %s33 = scalar_select %p32, 0, %s31
    %s34 = ssub.s32 1, %s21
    %s35 = smul.u32 %s34, %s22
    %s36 = sadd.s32 %s35, %s21
    %s37 = ssub.s32 1, %s33
    %s38 = smul.u32 %s37, %s29
    %s39 = sadd.s32 %s38, %s33
    %s40 = ssub.s32 %s36, %s39
    %p41 = scmp.eq.s32.totalorder %s40, 0
    %s43 = sadd.s32 %s42, 1
    %s44 = scalar_select %p41, %s42, %s43
    %p47 = pneg %p41
    %p48 = scmp.eq.s32.totalorder %s14, 3
    %p49 = por %p47, %p48
    %p50 = scmp.ne.s32.totalorder %s42, %s45
    %p51 = scmp.eq.s32.totalorder %s14, 0
    %p52 = por %p50, %p51
    %p53 = scmp.ne.s32.totalorder %s42, %s45
    %p54 = scmp.eq.s32.totalorder %s19, 3
    %p55 = por %p53, %p54
    %p56 = scmp.ne.s32.totalorder %s45, %s46
    %p57 = scmp.eq.s32.totalorder %s19, 0
    %p58 = por %p56, %p57
    %p59 = scmp.ne.s32.totalorder %s45, %s46
    %p60 = scmp.eq.s32.totalorder %s20, 3
    %p61 = por %p59, %p60
    %p63 = scmp.ne.s32.totalorder %s46, %s62
    %p64 = scmp.eq.s32.totalorder %s20, 0
    %p65 = por %p63, %p64
    %s67 = sadd.s32 %s66, 1
    %p70 = scmp.eq.s32.totalorder %s14, 3
    %p71 = scmp.ne.s32.totalorder %s66, %s68
    %p72 = scmp.eq.s32.totalorder %s14, 0
    %p73 = por %p71, %p72
    %p74 = scmp.ne.s32.totalorder %s66, %s68
    %p75 = scmp.eq.s32.totalorder %s19, 3
    %p76 = por %p74, %p75
    %p77 = scmp.ne.s32.totalorder %s68, %s69
    %p78 = scmp.eq.s32.totalorder %s19, 0
    %p79 = por %p77, %p78
    %p80 = scmp.ne.s32.totalorder %s68, %s69
    %p81 = scmp.eq.s32.totalorder %s20, 3
    %p82 = por %p80, %p81
    %p84 = scmp.ne.s32.totalorder %s69, %s83
    %p85 = scmp.eq.s32.totalorder %s20, 0
    %p86 = por %p84, %p85
    %s88 = sadd.s32 %s87, 1
    %p91 = scmp.eq.s32.totalorder %s14, 3
    %p92 = scmp.ne.s32.totalorder %s87, %s89
    %p93 = scmp.eq.s32.totalorder %s14, 0
    %p94 = por %p92, %p93
    %p95 = scmp.ne.s32.totalorder %s87, %s89
    %p96 = scmp.eq.s32.totalorder %s19, 3
    %p97 = por %p95, %p96
    %p98 = scmp.ne.s32.totalorder %s89, %s90
    %p99 = scmp.eq.s32.totalorder %s19, 0
    %p100 = por %p98, %p99
    %p101 = scmp.ne.s32.totalorder %s89, %s90
    %p102 = scmp.eq.s32.totalorder %s20, 3
    %p103 = por %p101, %p102
    %p105 = scmp.ne.s32.totalorder %s90, %s104
    %p106 = scmp.eq.s32.totalorder %s20, 0
    %p107 = por %p105, %p106
    %s109 = sadd.s32 %s108, 1
    %p112 = scmp.eq.s32.totalorder %s14, 3
    %p113 = scmp.ne.s32.totalorder %s108, %s110
    %p114 = scmp.eq.s32.totalorder %s14, 0
    %p115 = por %p113, %p114
    %p116 = scmp.ne.s32.totalorder %s108, %s110
    %p117 = scmp.eq.s32.totalorder %s19, 3
    %p118 = por %p116, %p117
    %p119 = scmp.ne.s32.totalorder %s110, %s111
    %p120 = scmp.eq.s32.totalorder %s19, 0
    %p121 = por %p119, %p120
    %p122 = scmp.ne.s32.totalorder %s110, %s111
    %p123 = scmp.eq.s32.totalorder %s20, 3
    %p124 = por %p122, %p123
    %p126 = scmp.ne.s32.totalorder %s111, %s125
    %p127 = scmp.eq.s32.totalorder %s20, 0
    %p128 = por %p126, %p127
    %s130 = sadd.s32 %s129, 1
    %p133 = scmp.eq.s32.totalorder %s14, 3
    %p134 = scmp.ne.s32.totalorder %s129, %s131
    %p135 = scmp.eq.s32.totalorder %s14, 0
    %p136 = por %p134, %p135
    %p137 = scmp.ne.s32.totalorder %s129, %s131
    %p138 = scmp.eq.s32.totalorder %s19, 3
    %p139 = por %p137, %p138
    %p140 = scmp.ne.s32.totalorder %s131, %s132
    %p141 = scmp.eq.s32.totalorder %s19, 0
    %p142 = por %p140, %p141
    %p143 = scmp.ne.s32.totalorder %s131, %s132
    %p144 = scmp.eq.s32.totalorder %s20, 3
    %p145 = por %p143, %p144
    %p147 = scmp.ne.s32.totalorder %s132, %s146
    %p148 = scmp.eq.s32.totalorder %s20, 0
    %p149 = por %p147, %p148
    %s151 = sadd.s32 %s150, 1
    %p154 = scmp.eq.s32.totalorder %s14, 3
    %p155 = scmp.ne.s32.totalorder %s150, %s152
    %p156 = scmp.eq.s32.totalorder %s14, 0
    %p157 = por %p155, %p156
    %p158 = scmp.ne.s32.totalorder %s150, %s152
    %p159 = scmp.eq.s32.totalorder %s19, 3
    %p160 = por %p158, %p159
    %p161 = scmp.ne.s32.totalorder %s152, %s153
    %p162 = scmp.eq.s32.totalorder %s19, 0
    %p163 = por %p161, %p162
    %p164 = scmp.ne.s32.totalorder %s152, %s153
    %p165 = scmp.eq.s32.totalorder %s20, 3
    %p166 = por %p164, %p165
    %p168 = scmp.ne.s32.totalorder %s153, %s167
    %p169 = scmp.eq.s32.totalorder %s20, 0
    %p170 = por %p168, %p169
    %s172 = sadd.s32 %s171, 1
    %p175 = scmp.eq.s32.totalorder %s14, 3
    %p176 = scmp.ne.s32.totalorder %s171, %s173
    %p177 = scmp.eq.s32.totalorder %s14, 0
    %p178 = por %p176, %p177
    %p179 = scmp.ne.s32.totalorder %s171, %s173
    %p180 = scmp.eq.s32.totalorder %s19, 3
    %p181 = por %p179, %p180
    %p182 = scmp.ne.s32.totalorder %s173, %s174
    %p183 = scmp.eq.s32.totalorder %s19, 0
    %p184 = por %p182, %p183
    %p185 = scmp.ne.s32.totalorder %s173, %s174
    %p186 = scmp.eq.s32.totalorder %s20, 3
    %p187 = por %p185, %p186
    %p189 = scmp.ne.s32.totalorder %s174, %s188
    %p190 = scmp.eq.s32.totalorder %s20, 0
    %p191 = por %p189, %p190
    %s193 = sadd.s32 %s192, 1
    %p196 = scmp.eq.s32.totalorder %s14, 3
    %p197 = scmp.ne.s32.totalorder %s192, %s194
    %p198 = scmp.eq.s32.totalorder %s14, 0
    %p199 = por %p197, %p198
    %p200 = scmp.ne.s32.totalorder %s192, %s194
    %p201 = scmp.eq.s32.totalorder %s19, 3
    %p202 = por %p200, %p201
    %p203 = scmp.ne.s32.totalorder %s194, %s195
    %p204 = scmp.eq.s32.totalorder %s19, 0
    %p205 = por %p203, %p204
    %p206 = scmp.ne.s32.totalorder %s194, %s195
    %p207 = scmp.eq.s32.totalorder %s20, 3
    %p208 = por %p206, %p207
    %p210 = scmp.ne.s32.totalorder %s195, %s209
    %p211 = scmp.eq.s32.totalorder %s20, 0
    %p212 = por %p210, %p211
    %s213 = smul.u32 %s21, %s22
    %s214 = smul.u32 %s33, %s29
    %s215 = ssub.s32 %s213, %s214
    %p216 = scmp.eq.s32.totalorder %s215, 0
    %s218 = sadd.s32 %s217, 1
    %s219 = scalar_select %p216, %s217, %s218
    %p222 = pneg %p216
    %p223 = scmp.eq.s32.totalorder %s14, 3
    %p224 = por %p222, %p223
    %p225 = scmp.ne.s32.totalorder %s217, %s220
    %p226 = scmp.eq.s32.totalorder %s14, 0
    %p227 = por %p225, %p226
    %p228 = scmp.ne.s32.totalorder %s217, %s220
    %p229 = scmp.eq.s32.totalorder %s19, 3
    %p230 = por %p228, %p229
    %p231 = scmp.ne.s32.totalorder %s220, %s221
    %p232 = scmp.eq.s32.totalorder %s19, 0
    %p233 = por %p231, %p232
    %p234 = scmp.ne.s32.totalorder %s220, %s221
    %p235 = scmp.eq.s32.totalorder %s20, 3
    %p236 = por %p234, %p235
    %p238 = scmp.ne.s32.totalorder %s221, %s237
    %p239 = scmp.eq.s32.totalorder %s20, 0
    %p240 = por %p238, %p239
    %p241 = scmp.le.s32.totalorder 1, %s14
    %p242 = scmp.lt.s32.totalorder %s14, 5
    %p243 = pnand %p241, %p242
    %p244 = pneg %p243
    // Predicated region
    $region9: #{tpu_custom_call.1} parent=5 // pred_check
      _
    $region10: #{tpu_custom_call.1} parent=5 // pred_check_branch
      %246 = sbr.rel (%p243) target = $region12
    $region11: #{tpu_custom_call.1} parent=5 // pred_region
      %s247 = ssub.s32 %s14, 1
      // Predicated region
      $region13: #{tpu_custom_call.1} parent=11 // pred_check
        %p248 = pneg %p79
      $region14: #{tpu_custom_call.1} parent=11 // pred_check_branch
        %250 = sbr.rel (%p248) target = $region16
      $region15: #{tpu_custom_call.1} parent=11 // pred_region
        _
      $region16: #{tpu_custom_call.1} parent=11 // pred_fallthru
        _
      // Predicated region
      $region17: #{tpu_custom_call.1} parent=11 // pred_check
        %p251 = pneg %p100
      $region18: #{tpu_custom_call.1} parent=11 // pred_check_branch
        %253 = sbr.rel (%p251) target = $region20
      $region19: #{tpu_custom_call.1} parent=11 // pred_region
        _
      $region20: #{tpu_custom_call.1} parent=11 // pred_fallthru
        _
      // Predicated region
      $region21: #{tpu_custom_call.1} parent=11 // pred_check
        %p254 = pneg %p121
      $region22: #{tpu_custom_call.1} parent=11 // pred_check_branch
        %256 = sbr.rel (%p254) target = $region24
      $region23: #{tpu_custom_call.1} parent=11 // pred_region
        _
      $region24: #{tpu_custom_call.1} parent=11 // pred_fallthru
        _
      // Predicated region
      $region25: #{tpu_custom_call.1} parent=11 // pred_check
        %p257 = pneg %p142
      $region26: #{tpu_custom_call.1} parent=11 // pred_check_branch
        %259 = sbr.rel (%p257) target = $region28
      $region27: #{tpu_custom_call.1} parent=11 // pred_region
        _
      $region28: #{tpu_custom_call.1} parent=11 // pred_fallthru
        _
      // Predicated region
      $region29: #{tpu_custom_call.1} parent=11 // pred_check
        %p260 = pneg %p163
      $region30: #{tpu_custom_call.1} parent=11 // pred_check_branch
        %262 = sbr.rel (%p260) target = $region32
      $region31: #{tpu_custom_call.1} parent=11 // pred_region
        _
      $region32: #{tpu_custom_call.1} parent=11 // pred_fallthru
        _
      // Predicated region
      $region33: #{tpu_custom_call.1} parent=11 // pred_check
        %p263 = pneg %p184
      $region34: #{tpu_custom_call.1} parent=11 // pred_check_branch
        %265 = sbr.rel (%p263) target = $region36
      $region35: #{tpu_custom_call.1} parent=11 // pred_region
        _
      $region36: #{tpu_custom_call.1} parent=11 // pred_fallthru
        _
      // Predicated region
      $region37: #{tpu_custom_call.1} parent=11 // pred_check
        %p266 = pneg %p205
      $region38: #{tpu_custom_call.1} parent=11 // pred_check_branch
        %268 = sbr.rel (%p266) target = $region40
      $region39: #{tpu_custom_call.1} parent=11 // pred_region
        _
      $region40: #{tpu_custom_call.1} parent=11 // pred_fallthru
        _
    $region12: #{tpu_custom_call.1} parent=5 // pred_fallthru
      _
    %p269 = scmp.lt.s32.totalorder %s14, 4
    // Predicated region
    $region41: #{tpu_custom_call.1} parent=5 // pred_check
      %p270 = pneg %p269
    $region42: #{tpu_custom_call.1} parent=5 // pred_check_branch
      %272 = sbr.rel (%p270) target = $region44
    $region43: #{tpu_custom_call.1} parent=5 // pred_region
      // Predicated region
      $region45: #{tpu_custom_call.1} parent=43 // pred_check
        %p273 = pneg %p52
      $region46: #{tpu_custom_call.1} parent=43 // pred_check_branch
        %275 = sbr.rel (%p273) target = $region48
      $region47: #{tpu_custom_call.1} parent=43 // pred_region
        %s276 = ssub.s32 1, %s21
        %s277 = smul.u32 %s276, %s22
        %s278 = sadd.s32 %s277, %s21
        %s279 = smul.u32 64, %s278
        %p280 = scmp.lt.s32.totalorder %s279, 127
        %s281 = scalar_select %p280, %s279, 127
        %s282 = smul.addr %s281, 8
        %s283 = scalar_lea.vmem %s0, %s282
        %s284 = ssub.s32 1, %s21
        %s285 = smul.u32 %s284, %s22
        %s286 = sadd.s32 %s285, %s21
        %s287 = smul.u32 64, %s286
      $region48: #{tpu_custom_call.1} parent=43 // pred_fallthru
        _
    $region44: #{tpu_custom_call.1} parent=5 // pred_fallthru
      _
    %p288 = scmp.le.s32.totalorder 1, %s14
    %p289 = scmp.lt.s32.totalorder %s14, 5
    %p290 = pnand %p288, %p289
    %p291 = pneg %p290
    // Predicated region
    $region49: #{tpu_custom_call.1} parent=5 // pred_check
      _
    $region50: #{tpu_custom_call.1} parent=5 // pred_check_branch
      %293 = sbr.rel (%p290) target = $region52
    $region51: #{tpu_custom_call.1} parent=5 // pred_region
      %s294 = ssub.s32 %s14, 1
      %s295 = ssub.s32 1, %s23
      %s296 = smul.u32 %s295, %s24
      %s297 = sadd.s32 %s296, %s23
      %s298 = smul.u32 64, %s297
      %p299 = scmp.lt.s32.totalorder %s298, 127
      %s300 = scalar_select %p299, %s298, 127
      %s301 = smul.addr %s300, 8
      %s302 = scalar_lea.vmem %s0, %s301
      %p303 = pneg %p58
      %p304 = pneg %p55
      %p305 = pneg %p79
      %p306 = pneg %p76
      %p307 = pneg %p100
      %p308 = pneg %p97
      %p309 = pneg %p121
      %p310 = pneg %p118
      %p311 = pneg %p142
      %p312 = pneg %p139
      %p313 = pneg %p163
      %p314 = pneg %p160
      %p315 = pneg %p184
      %p316 = pneg %p181
      %p317 = pneg %p205
      %p318 = pneg %p202
      %p319 = pneg %p233
      %p320 = pneg %p230
      %s321 = smul.u32 %s23, %s24
      %s322 = smul.u32 64, %s321
      %p323 = scmp.lt.s32.totalorder %s322, 127
      %s324 = scalar_select %p323, %s322, 127
      %s325 = smul.addr %s324, 8
      %s326 = scalar_lea.vmem %s8, %s325
      %s327 = ssub.s32 1, %s23
      %s328 = smul.u32 %s327, %s24
      %s329 = sadd.s32 %s328, %s23
      %s330 = smul.u32 64, %s329
      %p331 = scmp.lt.s32.totalorder %s330, 127
      %s332 = scalar_select %p331, %s330, 127
      %s333 = smul.addr %s332, 8
      %s334 = scalar_lea.vmem %s0, %s333
      %s335 = ssub.s32 1, %s23
      %s336 = smul.u32 %s335, %s24
      %s337 = sadd.s32 %s336, %s23
      %s338 = smul.u32 64, %s337
      %s339 = smul.u32 %s23, %s24
      %s340 = smul.u32 64, %s339
      %p341 = scmp.lt.s32.totalorder %s340, 127
      %s342 = scalar_select %p341, %s340, 127
      %s343 = smul.addr %s342, 8
      %s344 = scalar_lea.vmem %s8, %s343
      %s345 = smul.u32 %s23, %s24
      %s346 = smul.u32 64, %s345
      %s347 = smul.u32 %s24, 512
      %p348 = scmp.eq.s32.totalorder %s23, 0
      // Predicated region
      $region53: #{tpu_custom_call.1} parent=51 // pred_check
        %p349 = pneg %p348
      $region54: #{tpu_custom_call.1} parent=51 // pred_check_branch
        %351 = sbr.rel (%p349) target = $region56
      $region55: #{tpu_custom_call.1} parent=51 // pred_region
        %p352 = scmp.eq.s32.totalorder %s24, 0
        // Predicated region
        $region57: #{tpu_custom_call.1} parent=55 // pred_check
          %p353 = pneg %p352
        $region58: #{tpu_custom_call.1} parent=55 // pred_check_branch
          %355 = sbr.rel (%p353) target = $region60
        $region59: #{tpu_custom_call.1} parent=55 // pred_region
          %vm356 = vcmask 261120
          %357 = vst.msk [vmem:[#allocation2] sm:$0xff] %vm356, 0.0
        $region60: #{tpu_custom_call.1} parent=55 // pred_fallthru
          _
        %v358 = vld [vmem:[%s334] sm:$0xff]
        %v359 = vld [vmem:[%s334 + $0x8] sm:$0xff]
        %v360 = vld [vmem:[%s334 + $0x10] sm:$0xff]
        %v361 = vld [vmem:[%s334 + $0x18] sm:$0xff]
        %v362 = vld [vmem:[%s334 + $0x20] sm:$0xff]
        %v363 = vld [vmem:[%s334 + $0x28] sm:$0xff]
        %v364 = vld [vmem:[%s334 + $0x30] sm:$0xff]
        %v365 = vld [vmem:[%s334 + $0x38] sm:$0xff]
        %v366 = vld [vmem:[%s334 + $0x40] sm:$0xff]
        %v367 = vld [vmem:[%s334 + $0x48] sm:$0xff]
        %v368 = vld [vmem:[%s334 + $0x50] sm:$0xff]
        %v369 = vld [vmem:[%s334 + $0x58] sm:$0xff]
        %v370 = vld [vmem:[%s334 + $0x60] sm:$0xff]
        %v371 = vld [vmem:[%s334 + $0x68] sm:$0xff]
        %v372 = vld [vmem:[%s334 + $0x70] sm:$0xff]
        %v373 = vld [vmem:[%s334 + $0x78] sm:$0xff]
        %v374 = vld [vmem:[%s334 + $0x80] sm:$0xff]
        %v375 = vld [vmem:[%s334 + $0x88] sm:$0xff]
        %v376 = vld [vmem:[%s334 + $0x90] sm:$0xff]
        %v377 = vld [vmem:[%s334 + $0x98] sm:$0xff]
        %v378 = vld [vmem:[%s334 + $0xa0] sm:$0xff]
        %v379 = vld [vmem:[%s334 + $0xa8] sm:$0xff]
        %v380 = vld [vmem:[%s334 + $0xb0] sm:$0xff]
        %v381 = vld [vmem:[%s334 + $0xb8] sm:$0xff]
        %v382 = vld [vmem:[%s334 + $0xc0] sm:$0xff]
        %v383 = vld [vmem:[%s334 + $0xc8] sm:$0xff]
        %v384 = vld [vmem:[%s334 + $0xd0] sm:$0xff]
        %v385 = vld [vmem:[%s334 + $0xd8] sm:$0xff]
        %v386 = vld [vmem:[%s334 + $0xe0] sm:$0xff]
        %v387 = vld [vmem:[%s334 + $0xe8] sm:$0xff]
        %v388 = vld [vmem:[%s334 + $0xf0] sm:$0xff]
        %v389 = vld [vmem:[%s334 + $0xf8] sm:$0xff]
        %v390 = vld [vmem:[%s334 + $0x100] sm:$0xff]
        %v391 = vld [vmem:[%s334 + $0x108] sm:$0xff]
        %v392 = vld [vmem:[%s334 + $0x110] sm:$0xff]
        %v393 = vld [vmem:[%s334 + $0x118] sm:$0xff]
        %v394 = vld [vmem:[%s334 + $0x120] sm:$0xff]
        %v395 = vld [vmem:[%s334 + $0x128] sm:$0xff]
        %v396 = vld [vmem:[%s334 + $0x130] sm:$0xff]
        %v397 = vld [vmem:[%s334 + $0x138] sm:$0xff]
        %v398 = vld [vmem:[%s334 + $0x140] sm:$0xff]
        %v399 = vld [vmem:[%s334 + $0x148] sm:$0xff]
        %v400 = vld [vmem:[%s334 + $0x150] sm:$0xff]
        %v401 = vld [vmem:[%s334 + $0x158] sm:$0xff]
        %v402 = vld [vmem:[%s334 + $0x160] sm:$0xff]
        %v403 = vld [vmem:[%s334 + $0x168] sm:$0xff]
        %v404 = vld [vmem:[%s334 + $0x170] sm:$0xff]
        %v405 = vld [vmem:[%s334 + $0x178] sm:$0xff]
        %v406 = vld [vmem:[%s334 + $0x180] sm:$0xff]
        %v407 = vld [vmem:[%s334 + $0x188] sm:$0xff]
        %v408 = vld [vmem:[%s334 + $0x190] sm:$0xff]
        %v409 = vld [vmem:[%s334 + $0x198] sm:$0xff]
        %v410 = vld [vmem:[%s334 + $0x1a0] sm:$0xff]
        %v411 = vld [vmem:[%s334 + $0x1a8] sm:$0xff]
        %v412 = vld [vmem:[%s334 + $0x1b0] sm:$0xff]
        %v413 = vld [vmem:[%s334 + $0x1b8] sm:$0xff]
        %v414 = vld [vmem:[%s334 + $0x1c0] sm:$0xff]
        %v415 = vld [vmem:[%s334 + $0x1c8] sm:$0xff]
        %v416 = vld [vmem:[%s334 + $0x1d0] sm:$0xff]
        %v417 = vld [vmem:[%s334 + $0x1d8] sm:$0xff]
        %v418 = vld [vmem:[%s334 + $0x1e0] sm:$0xff]
        %v419 = vld [vmem:[%s334 + $0x1e8] sm:$0xff]
        %v420 = vld [vmem:[%s334 + $0x1f0] sm:$0xff]
        %v421 = vld [vmem:[%s334 + $0x1f8] sm:$0xff]
        %s422 = scalar_lea.vmem [#allocation4], %s347
        %vm423 = vcmask 261120
        %424 = vst.msk [vmem:[%s422] sm:$0xff] %vm423, %v358
        %425 = vst.msk [vmem:[%s422 + $0x8] sm:$0xff] %vm423, %v359
        %426 = vst.msk [vmem:[%s422 + $0x10] sm:$0xff] %vm423, %v360
        %427 = vst.msk [vmem:[%s422 + $0x18] sm:$0xff] %vm423, %v361
        %428 = vst.msk [vmem:[%s422 + $0x20] sm:$0xff] %vm423, %v362
        %429 = vst.msk [vmem:[%s422 + $0x28] sm:$0xff] %vm423, %v363
        %430 = vst.msk [vmem:[%s422 + $0x30] sm:$0xff] %vm423, %v364
        %431 = vst.msk [vmem:[%s422 + $0x38] sm:$0xff] %vm423, %v365
        %432 = vst.msk [vmem:[%s422 + $0x40] sm:$0xff] %vm423, %v366
        %433 = vst.msk [vmem:[%s422 + $0x48] sm:$0xff] %vm423, %v367
        %434 = vst.msk [vmem:[%s422 + $0x50] sm:$0xff] %vm423, %v368
        %435 = vst.msk [vmem:[%s422 + $0x58] sm:$0xff] %vm423, %v369
        %436 = vst.msk [vmem:[%s422 + $0x60] sm:$0xff] %vm423, %v370
        %437 = vst.msk [vmem:[%s422 + $0x68] sm:$0xff] %vm423, %v371
        %438 = vst.msk [vmem:[%s422 + $0x70] sm:$0xff] %vm423, %v372
        %439 = vst.msk [vmem:[%s422 + $0x78] sm:$0xff] %vm423, %v373
        %440 = vst.msk [vmem:[%s422 + $0x80] sm:$0xff] %vm423, %v374
        %441 = vst.msk [vmem:[%s422 + $0x88] sm:$0xff] %vm423, %v375
        %442 = vst.msk [vmem:[%s422 + $0x90] sm:$0xff] %vm423, %v376
        %443 = vst.msk [vmem:[%s422 + $0x98] sm:$0xff] %vm423, %v377
        %444 = vst.msk [vmem:[%s422 + $0xa0] sm:$0xff] %vm423, %v378
        %445 = vst.msk [vmem:[%s422 + $0xa8] sm:$0xff] %vm423, %v379
        %446 = vst.msk [vmem:[%s422 + $0xb0] sm:$0xff] %vm423, %v380
        %447 = vst.msk [vmem:[%s422 + $0xb8] sm:$0xff] %vm423, %v381
        %448 = vst.msk [vmem:[%s422 + $0xc0] sm:$0xff] %vm423, %v382
        %449 = vst.msk [vmem:[%s422 + $0xc8] sm:$0xff] %vm423, %v383
        %450 = vst.msk [vmem:[%s422 + $0xd0] sm:$0xff] %vm423, %v384
        %451 = vst.msk [vmem:[%s422 + $0xd8] sm:$0xff] %vm423, %v385
        %452 = vst.msk [vmem:[%s422 + $0xe0] sm:$0xff] %vm423, %v386
        %453 = vst.msk [vmem:[%s422 + $0xe8] sm:$0xff] %vm423, %v387
        %454 = vst.msk [vmem:[%s422 + $0xf0] sm:$0xff] %vm423, %v388
        %455 = vst.msk [vmem:[%s422 + $0xf8] sm:$0xff] %vm423, %v389
        %456 = vst.msk [vmem:[%s422 + $0x100] sm:$0xff] %vm423, %v390
        %457 = vst.msk [vmem:[%s422 + $0x108] sm:$0xff] %vm423, %v391
        %458 = vst.msk [vmem:[%s422 + $0x110] sm:$0xff] %vm423, %v392
        %459 = vst.msk [vmem:[%s422 + $0x118] sm:$0xff] %vm423, %v393
        %460 = vst.msk [vmem:[%s422 + $0x120] sm:$0xff] %vm423, %v394
        %461 = vst.msk [vmem:[%s422 + $0x128] sm:$0xff] %vm423, %v395
        %462 = vst.msk [vmem:[%s422 + $0x130] sm:$0xff] %vm423, %v396
        %463 = vst.msk [vmem:[%s422 + $0x138] sm:$0xff] %vm423, %v397
        %464 = vst.msk [vmem:[%s422 + $0x140] sm:$0xff] %vm423, %v398
        %465 = vst.msk [vmem:[%s422 + $0x148] sm:$0xff] %vm423, %v399
        %466 = vst.msk [vmem:[%s422 + $0x150] sm:$0xff] %vm423, %v400
        %467 = vst.msk [vmem:[%s422 + $0x158] sm:$0xff] %vm423, %v401
        %468 = vst.msk [vmem:[%s422 + $0x160] sm:$0xff] %vm423, %v402
        %469 = vst.msk [vmem:[%s422 + $0x168] sm:$0xff] %vm423, %v403
        %470 = vst.msk [vmem:[%s422 + $0x170] sm:$0xff] %vm423, %v404
        %471 = vst.msk [vmem:[%s422 + $0x178] sm:$0xff] %vm423, %v405
        %472 = vst.msk [vmem:[%s422 + $0x180] sm:$0xff] %vm423, %v406
        %473 = vst.msk [vmem:[%s422 + $0x188] sm:$0xff] %vm423, %v407
        %474 = vst.msk [vmem:[%s422 + $0x190] sm:$0xff] %vm423, %v408
        %475 = vst.msk [vmem:[%s422 + $0x198] sm:$0xff] %vm423, %v409
        %476 = vst.msk [vmem:[%s422 + $0x1a0] sm:$0xff] %vm423, %v410
        %477 = vst.msk [vmem:[%s422 + $0x1a8] sm:$0xff] %vm423, %v411
        %478 = vst.msk [vmem:[%s422 + $0x1b0] sm:$0xff] %vm423, %v412
        %479 = vst.msk [vmem:[%s422 + $0x1b8] sm:$0xff] %vm423, %v413
        %480 = vst.msk [vmem:[%s422 + $0x1c0] sm:$0xff] %vm423, %v414
        %481 = vst.msk [vmem:[%s422 + $0x1c8] sm:$0xff] %vm423, %v415
        %482 = vst.msk [vmem:[%s422 + $0x1d0] sm:$0xff] %vm423, %v416
        %483 = vst.msk [vmem:[%s422 + $0x1d8] sm:$0xff] %vm423, %v417
        %484 = vst.msk [vmem:[%s422 + $0x1e0] sm:$0xff] %vm423, %v418
        %485 = vst.msk [vmem:[%s422 + $0x1e8] sm:$0xff] %vm423, %v419
        %486 = vst.msk [vmem:[%s422 + $0x1f0] sm:$0xff] %vm423, %v420
        %487 = vst.msk [vmem:[%s422 + $0x1f8] sm:$0xff] %vm423, %v421
        %v488 = vlaneseq
        %v489 = vand.u32 %v488, 127
        %v490 = vadd.s32 %v489, 128
        %v491 = vadd.s32 %v489, 256
        %v492 = vadd.s32 %v489, 384
        %v493 = vstv %s347
        %v494 = vadd.s32 %v489, %v493
        %v495 = vadd.s32 %v490, %v493
        %v496 = vadd.s32 %v491, %v493
        %v497 = vadd.s32 %v492, %v493
        %v498 = vcvt.s32.f32 %v494
        %v499 = vcvt.s32.f32 %v495
        %v500 = vcvt.s32.f32 %v496
        %v501 = vcvt.s32.f32 %v497
        %v502 = vld [vmem:[%s1] sm:$0xff]
        %504 = vset.pattern.permute.xlu0 0
        %505 = vperm.xlu0 %504, %v502
        %v506 = vpop.permute.xlu0 %505
        %vm508 = vcmp.ge.f32.partialorder %v498, %v506
        %vm509 = vcmp.ge.f32.partialorder %v499, %v506
        %vm510 = vcmp.ge.f32.partialorder %v500, %v506
        %vm511 = vcmp.ge.f32.partialorder %v501, %v506
        %512 = vset.pattern.permute.xlu0 1
        %513 = vperm.xlu0 %512, %v502
        %v514 = vpop.permute.xlu0 %513
        %vm516 = vcmp.lt.f32.partialorder %v498, %v514
        %vm517 = vcmp.lt.f32.partialorder %v499, %v514
        %vm518 = vcmp.lt.f32.partialorder %v500, %v514
        %vm519 = vcmp.lt.f32.partialorder %v501, %v514
        %vm520 = vmand %vm508, %vm516
        %vm521 = vmand %vm509, %vm517
        %vm522 = vmand %vm510, %vm518
        %vm523 = vmand %vm511, %vm519
        %v524 = vld [vmem:[#allocation2] sm:$0xff]
        %v525 = vsel %vm520, 1, 0
        %v526 = vsel %vm521, 1, 0
        %v527 = vsel %vm522, 1, 0
        %v528 = vsel %vm523, 1, 0
        %v529 = vcvt.s32.f32 %v525
        %v530 = vcvt.s32.f32 %v526
        %v531 = vcvt.s32.f32 %v527
        %v532 = vcvt.s32.f32 %v528
        %533 = vmatprep.subr.mxu0 0.0
        %534 = vmatpush1.msra.mxu0 %v358
        %535 = vmatprep.subr.mxu0 0.0
        %536 = vmatpush1.msra.mxu0 %v359
        %537 = vmatprep.subr.mxu0 0.0
        %538 = vmatpush1.msra.mxu0 %v360
        %539 = vmatprep.subr.mxu0 0.0
        %540 = vmatpush1.msra.mxu0 %v361
        %541 = vmatprep.subr.mxu0 0.0
        %542 = vmatpush1.msra.mxu0 %v362
        %543 = vmatprep.subr.mxu0 0.0
        %544 = vmatpush1.msra.mxu0 %v363
        %545 = vmatprep.subr.mxu0 0.0
        %546 = vmatpush1.msra.mxu0 %v364
        %547 = vmatprep.subr.mxu0 0.0
        %548 = vmatpush1.msra.mxu0 %v365
        %549 = vmatprep.subr.mxu0 0.0
        %550 = vmatpush1.msra.mxu0 %v366
        %551 = vmatprep.subr.mxu0 0.0
        %552 = vmatpush1.msra.mxu0 %v367
        %553 = vmatprep.subr.mxu0 0.0
        %554 = vmatpush1.msra.mxu0 %v368
        %555 = vmatprep.subr.mxu0 0.0
        %556 = vmatpush1.msra.mxu0 %v369
        %557 = vmatprep.subr.mxu0 0.0
        %558 = vmatpush1.msra.mxu0 %v370
        %559 = vmatprep.subr.mxu0 0.0
        %560 = vmatpush1.msra.mxu0 %v371
        %561 = vmatprep.subr.mxu0 0.0
        %562 = vmatpush1.msra.mxu0 %v372
        %563 = vmatprep.subr.mxu0 0.0
        %564 = vmatpush1.msra.mxu0 %v373
        %565 = vmatprep.subr.mxu0 0.0
        %566 = vmatpush1.msra.mxu0 %v374
        %567 = vmatprep.subr.mxu0 0.0
        %568 = vmatpush1.msra.mxu0 %v375
        %569 = vmatprep.subr.mxu0 0.0
        %570 = vmatpush1.msra.mxu0 %v376
        %571 = vmatprep.subr.mxu0 0.0
        %572 = vmatpush1.msra.mxu0 %v377
        %573 = vmatprep.subr.mxu0 0.0
        %574 = vmatpush1.msra.mxu0 %v378
        %575 = vmatprep.subr.mxu0 0.0
        %576 = vmatpush1.msra.mxu0 %v379
        %577 = vmatprep.subr.mxu0 0.0
        %578 = vmatpush1.msra.mxu0 %v380
        %579 = vmatprep.subr.mxu0 0.0
        %580 = vmatpush1.msra.mxu0 %v381
        %581 = vmatprep.subr.mxu0 0.0
        %582 = vmatpush1.msra.mxu0 %v382
        %583 = vmatprep.subr.mxu0 0.0
        %584 = vmatpush1.msra.mxu0 %v383
        %585 = vmatprep.subr.mxu0 0.0
        %586 = vmatpush1.msra.mxu0 %v384
        %587 = vmatprep.subr.mxu0 0.0
        %588 = vmatpush1.msra.mxu0 %v385
        %589 = vmatprep.subr.mxu0 0.0
        %590 = vmatpush1.msra.mxu0 %v386
        %591 = vmatprep.subr.mxu0 0.0
        %592 = vmatpush1.msra.mxu0 %v387
        %593 = vmatprep.subr.mxu0 0.0
        %594 = vmatpush1.msra.mxu0 %v388
        %595 = vmatprep.subr.mxu0 0.0
        %596 = vmatpush1.msra.mxu0 %v389
        %597 = vmatprep.mubr.f32.mxu0 %v530
        %598 = vmatmul.mubr.f32.gmra.mrb[0].mxu0 %v529
        %v599 = vpop.f32.mrb[0].mxu0
        %v600 = vadd.f32 0.0, %v599
        %v601 = vpop.f32.mrb[0].mxu0
        %602 = vdwg.mxu0
        %603 = vmatprep.subr.mxu0 0.0
        %604 = vmatpush1.msra.mxu0 %v390
        %605 = vmatprep.subr.mxu0 0.0
        %606 = vmatpush1.msra.mxu0 %v391
        %607 = vmatprep.subr.mxu0 0.0
        %608 = vmatpush1.msra.mxu0 %v392
        %609 = vmatprep.subr.mxu0 0.0
        %610 = vmatpush1.msra.mxu0 %v393
        %611 = vmatprep.subr.mxu0 0.0
        %612 = vmatpush1.msra.mxu0 %v394
        %613 = vmatprep.subr.mxu0 0.0
        %614 = vmatpush1.msra.mxu0 %v395
        %615 = vmatprep.subr.mxu0 0.0
        %616 = vmatpush1.msra.mxu0 %v396
        %617 = vmatprep.subr.mxu0 0.0
        %618 = vmatpush1.msra.mxu0 %v397
        %619 = vmatprep.subr.mxu0 0.0
        %620 = vmatpush1.msra.mxu0 %v398
        %621 = vmatprep.subr.mxu0 0.0
        %622 = vmatpush1.msra.mxu0 %v399
        %623 = vmatprep.subr.mxu0 0.0
        %624 = vmatpush1.msra.mxu0 %v400
        %625 = vmatprep.subr.mxu0 0.0
        %626 = vmatpush1.msra.mxu0 %v401
        %627 = vmatprep.subr.mxu0 0.0
        %628 = vmatpush1.msra.mxu0 %v402
        %629 = vmatprep.subr.mxu0 0.0
        %630 = vmatpush1.msra.mxu0 %v403
        %631 = vmatprep.subr.mxu0 0.0
        %632 = vmatpush1.msra.mxu0 %v404
        %633 = vmatprep.subr.mxu0 0.0
        %634 = vmatpush1.msra.mxu0 %v405
        %635 = vmatprep.subr.mxu0 0.0
        %636 = vmatpush1.msra.mxu0 %v406
        %637 = vmatprep.subr.mxu0 0.0
        %638 = vmatpush1.msra.mxu0 %v407
        %639 = vmatprep.subr.mxu0 0.0
        %640 = vmatpush1.msra.mxu0 %v408
        %641 = vmatprep.subr.mxu0 0.0
        %642 = vmatpush1.msra.mxu0 %v409
        %643 = vmatprep.subr.mxu0 0.0
        %644 = vmatpush1.msra.mxu0 %v410
        %645 = vmatprep.subr.mxu0 0.0
        %646 = vmatpush1.msra.mxu0 %v411
        %647 = vmatprep.subr.mxu0 0.0
        %648 = vmatpush1.msra.mxu0 %v412
        %649 = vmatprep.subr.mxu0 0.0
        %650 = vmatpush1.msra.mxu0 %v413
        %651 = vmatprep.subr.mxu0 0.0
        %652 = vmatpush1.msra.mxu0 %v414
        %653 = vmatprep.subr.mxu0 0.0
        %654 = vmatpush1.msra.mxu0 %v415
        %655 = vmatprep.subr.mxu0 0.0
        %656 = vmatpush1.msra.mxu0 %v416
        %657 = vmatprep.subr.mxu0 0.0
        %658 = vmatpush1.msra.mxu0 %v417
        %659 = vmatprep.subr.mxu0 0.0
        %660 = vmatpush1.msra.mxu0 %v418
        %661 = vmatprep.subr.mxu0 0.0
        %662 = vmatpush1.msra.mxu0 %v419
        %663 = vmatprep.subr.mxu0 0.0
        %664 = vmatpush1.msra.mxu0 %v420
        %665 = vmatprep.subr.mxu0 0.0
        %666 = vmatpush1.msra.mxu0 %v421
        %667 = vmatprep.mubr.f32.mxu0 %v532
        %668 = vmatmul.mubr.f32.gmra.mrb[0].mxu0 %v531
        %v669 = vpop.f32.mrb[0].mxu0
        %v670 = vadd.f32 %v600, %v669
        %v671 = vpop.f32.mrb[0].mxu0
        %672 = vdwg.mxu0
        %v673 = vadd.f32 %v524, %v670
        %674 = vst.msk [vmem:[#allocation2] sm:$0xff] %vm423, %v673
        %p675 = scmp.eq.s32.totalorder %s24, 1
        // Predicated region
        $region61: #{tpu_custom_call.1} parent=55 // pred_check
          %p676 = pneg %p675
        $region62: #{tpu_custom_call.1} parent=55 // pred_check_branch
          %678 = sbr.rel (%p676) target = $region64
        $region63: #{tpu_custom_call.1} parent=55 // pred_region
          %v679 = vld [vmem:[#allocation2] sm:$0xff]
          %v680 = vld [vmem:[%s1] sm:$0xff]
          %682 = vset.pattern.permute.xlu0 2
          %683 = vperm.xlu0 %682, %v680
          %v684 = vpop.permute.xlu0 %683
          %v686 = vmul.f32 %v679, %v684
          %v687 = vld [vmem:[%s3] sm:$0xff]
          %v688 = vld [vmem:[%s3 + $0x8] sm:$0xff]
          %v689 = vld [vmem:[%s3 + $0x10] sm:$0xff]
          %v690 = vld [vmem:[%s3 + $0x18] sm:$0xff]
          %v691 = vld [vmem:[%s4] sm:$0x1]
          %v693 = vlaneseq
          %v694 = vshrl.u32 %v693, 7
          %v695 = vsub.s32 0, %v694
          %v696 = vrot.slane %v691, %v695
          %v699 = vsel %vm423, %v686, 0
          %701 = vmatprep.subr.mxu0 0.0
          %702 = vmatpush1.msra.mxu0 %v687
          %703 = vmatprep.subr.mxu0 0.0
          %704 = vmatpush1.msra.mxu0 %v688
          %705 = vmatprep.subr.mxu0 0.0
          %706 = vmatpush1.msra.mxu0 %v689
          %707 = vmatprep.subr.mxu0 0.0
          %708 = vmatpush1.msra.mxu0 %v690
          %709 = vmatprep.subr.mxu0 0.0
          %710 = vmatpush1.msra.mxu0 0.0
          %711 = vmatprep.subr.mxu0 0.0
          %712 = vmatpush1.msra.mxu0 0.0
          %713 = vmatprep.subr.mxu0 0.0
          %714 = vmatpush1.msra.mxu0 0.0
          %715 = vmatprep.subr.mxu0 0.0
          %716 = vmatpush1.msra.mxu0 0.0
          %717 = vmatprep.subr.mxu0 0.0
          %718 = vmatpush1.msra.mxu0 0.0
          %719 = vmatprep.subr.mxu0 0.0
          %720 = vmatpush1.msra.mxu0 0.0
          %721 = vmatprep.subr.mxu0 0.0
          %722 = vmatpush1.msra.mxu0 0.0
          %723 = vmatprep.subr.mxu0 0.0
          %724 = vmatpush1.msra.mxu0 0.0
          %725 = vmatprep.subr.mxu0 0.0
          %726 = vmatpush1.msra.mxu0 0.0
          %727 = vmatprep.subr.mxu0 0.0
          %728 = vmatpush1.msra.mxu0 0.0
          %729 = vmatprep.subr.mxu0 0.0
          %730 = vmatpush1.msra.mxu0 0.0
          %731 = vmatprep.subr.mxu0 0.0
          %732 = vmatpush1.msra.mxu0 0.0
          %733 = vmatprep.subr.mxu0 0.0
          %734 = vmatpush1.msra.mxu0 0.0
          %735 = vmatprep.subr.mxu0 0.0
          %736 = vmatpush1.msra.mxu0 0.0
          %737 = vmatprep.subr.mxu0 0.0
          %738 = vmatpush1.msra.mxu0 0.0
          %739 = vmatprep.subr.mxu0 0.0
          %740 = vmatpush1.msra.mxu0 0.0
          %741 = vmatprep.subr.mxu0 0.0
          %742 = vmatpush1.msra.mxu0 0.0
          %743 = vmatprep.subr.mxu0 0.0
          %744 = vmatpush1.msra.mxu0 0.0
          %745 = vmatprep.subr.mxu0 0.0
          %746 = vmatpush1.msra.mxu0 0.0
          %747 = vmatprep.subr.mxu0 0.0
          %748 = vmatpush1.msra.mxu0 0.0
          %749 = vmatprep.subr.mxu0 0.0
          %750 = vmatpush1.msra.mxu0 0.0
          %751 = vmatprep.subr.mxu0 0.0
          %752 = vmatpush1.msra.mxu0 0.0
          %753 = vmatprep.subr.mxu0 0.0
          %754 = vmatpush1.msra.mxu0 0.0
          %755 = vmatprep.subr.mxu0 0.0
          %756 = vmatpush1.msra.mxu0 0.0
          %757 = vmatprep.subr.mxu0 0.0
          %758 = vmatpush1.msra.mxu0 0.0
          %759 = vmatprep.subr.mxu0 0.0
          %760 = vmatpush1.msra.mxu0 0.0
          %761 = vmatprep.subr.mxu0 0.0
          %762 = vmatpush1.msra.mxu0 0.0
          %763 = vmatprep.subr.mxu0 0.0
          %764 = vmatpush1.msra.mxu0 0.0
          %765 = vmatprep.mubr.f32.mxu0 0.0
          %766 = vmatmul.mubr.f32.gmra.mrb[0].mxu0 %v699
          %v767 = vpop.f32.mrb[0].mxu0
          %v768 = vadd.f32 %v696, %v767
          %v769 = vpop.f32.mrb[0].mxu0
          %770 = vdwg.mxu0
          %v771 = vmax.f32 %v768, 0.0
          %v772 = vld [vmem:[%s6] sm:$0xff]
          %v773 = vld [vmem:[%s6 + $0x8] sm:$0xff]
          %v774 = vld [vmem:[%s6 + $0x10] sm:$0xff]
          %v775 = vld [vmem:[%s6 + $0x18] sm:$0xff]
          %v777 = vsel %vm423, %v771, 0
          %779 = vmatprep.subr.mxu0 0.0
          %780 = vmatpush1.msra.mxu0 %v772
          %781 = vmatprep.subr.mxu0 0.0
          %782 = vmatpush1.msra.mxu0 %v773
          %783 = vmatprep.subr.mxu0 0.0
          %784 = vmatpush1.msra.mxu0 %v774
          %785 = vmatprep.subr.mxu0 0.0
          %786 = vmatpush1.msra.mxu0 %v775
          %787 = vmatprep.subr.mxu0 0.0
          %788 = vmatpush1.msra.mxu0 0.0
          %789 = vmatprep.subr.mxu0 0.0
          %790 = vmatpush1.msra.mxu0 0.0
          %791 = vmatprep.subr.mxu0 0.0
          %792 = vmatpush1.msra.mxu0 0.0
          %793 = vmatprep.subr.mxu0 0.0
          %794 = vmatpush1.msra.mxu0 0.0
          %795 = vmatprep.subr.mxu0 0.0
          %796 = vmatpush1.msra.mxu0 0.0
          %797 = vmatprep.subr.mxu0 0.0
          %798 = vmatpush1.msra.mxu0 0.0
          %799 = vmatprep.subr.mxu0 0.0
          %800 = vmatpush1.msra.mxu0 0.0
          %801 = vmatprep.subr.mxu0 0.0
          %802 = vmatpush1.msra.mxu0 0.0
          %803 = vmatprep.subr.mxu0 0.0
          %804 = vmatpush1.msra.mxu0 0.0
          %805 = vmatprep.subr.mxu0 0.0
          %806 = vmatpush1.msra.mxu0 0.0
          %807 = vmatprep.subr.mxu0 0.0
          %808 = vmatpush1.msra.mxu0 0.0
          %809 = vmatprep.subr.mxu0 0.0
          %810 = vmatpush1.msra.mxu0 0.0
          %811 = vmatprep.subr.mxu0 0.0
          %812 = vmatpush1.msra.mxu0 0.0
          %813 = vmatprep.subr.mxu0 0.0
          %814 = vmatpush1.msra.mxu0 0.0
          %815 = vmatprep.subr.mxu0 0.0
          %816 = vmatpush1.msra.mxu0 0.0
          %817 = vmatprep.subr.mxu0 0.0
          %818 = vmatpush1.msra.mxu0 0.0
          %819 = vmatprep.subr.mxu0 0.0
          %820 = vmatpush1.msra.mxu0 0.0
          %821 = vmatprep.subr.mxu0 0.0
          %822 = vmatpush1.msra.mxu0 0.0
          %823 = vmatprep.subr.mxu0 0.0
          %824 = vmatpush1.msra.mxu0 0.0
          %825 = vmatprep.subr.mxu0 0.0
          %826 = vmatpush1.msra.mxu0 0.0
          %827 = vmatprep.subr.mxu0 0.0
          %828 = vmatpush1.msra.mxu0 0.0
          %829 = vmatprep.subr.mxu0 0.0
          %830 = vmatpush1.msra.mxu0 0.0
          %831 = vmatprep.subr.mxu0 0.0
          %832 = vmatpush1.msra.mxu0 0.0
          %833 = vmatprep.subr.mxu0 0.0
          %834 = vmatpush1.msra.mxu0 0.0
          %835 = vmatprep.subr.mxu0 0.0
          %836 = vmatpush1.msra.mxu0 0.0
          %837 = vmatprep.subr.mxu0 0.0
          %838 = vmatpush1.msra.mxu0 0.0
          %839 = vmatprep.subr.mxu0 0.0
          %840 = vmatpush1.msra.mxu0 0.0
          %841 = vmatprep.subr.mxu0 0.0
          %842 = vmatpush1.msra.mxu0 0.0
          %843 = vmatprep.mubr.f32.mxu0 0.0
          %844 = vmatmul.mubr.f32.gmra.mrb[0].mxu0 %v777
          %v845 = vpop.f32.mrb[0].mxu0
          %v846 = vadd.f32 0.0, %v845
          %v847 = vpop.f32.mrb[0].mxu0
          %848 = vdwg.mxu0
          %849 = vst.msk [vmem:[#allocation3] sm:$0xff] %vm423, %v846
        $region64: #{tpu_custom_call.1} parent=55 // pred_fallthru
          _
      $region56: #{tpu_custom_call.1} parent=51 // pred_fallthru
        _
      %p850 = scmp.eq.s32.totalorder %s23, 1
      // Predicated region
      $region65: #{tpu_custom_call.1} parent=51 // pred_check
        %p851 = pneg %p850
      $region66: #{tpu_custom_call.1} parent=51 // pred_check_branch
        %853 = sbr.rel (%p851) target = $region68
      $region67: #{tpu_custom_call.1} parent=51 // pred_region
        %s854 = scalar_lea.vmem [#allocation4], %s347
        %v855 = vld [vmem:[%s854] sm:$0xff]
        %v856 = vld [vmem:[%s854 + $0x8] sm:$0xff]
        %v857 = vld [vmem:[%s854 + $0x10] sm:$0xff]
        %v858 = vld [vmem:[%s854 + $0x18] sm:$0xff]
        %v859 = vld [vmem:[%s854 + $0x20] sm:$0xff]
        %v860 = vld [vmem:[%s854 + $0x28] sm:$0xff]
        %v861 = vld [vmem:[%s854 + $0x30] sm:$0xff]
        %v862 = vld [vmem:[%s854 + $0x38] sm:$0xff]
        %v863 = vld [vmem:[%s854 + $0x40] sm:$0xff]
        %v864 = vld [vmem:[%s854 + $0x48] sm:$0xff]
        %v865 = vld [vmem:[%s854 + $0x50] sm:$0xff]
        %v866 = vld [vmem:[%s854 + $0x58] sm:$0xff]
        %v867 = vld [vmem:[%s854 + $0x60] sm:$0xff]
        %v868 = vld [vmem:[%s854 + $0x68] sm:$0xff]
        %v869 = vld [vmem:[%s854 + $0x70] sm:$0xff]
        %v870 = vld [vmem:[%s854 + $0x78] sm:$0xff]
        %v871 = vld [vmem:[%s854 + $0x80] sm:$0xff]
        %v872 = vld [vmem:[%s854 + $0x88] sm:$0xff]
        %v873 = vld [vmem:[%s854 + $0x90] sm:$0xff]
        %v874 = vld [vmem:[%s854 + $0x98] sm:$0xff]
        %v875 = vld [vmem:[%s854 + $0xa0] sm:$0xff]
        %v876 = vld [vmem:[%s854 + $0xa8] sm:$0xff]
        %v877 = vld [vmem:[%s854 + $0xb0] sm:$0xff]
        %v878 = vld [vmem:[%s854 + $0xb8] sm:$0xff]
        %v879 = vld [vmem:[%s854 + $0xc0] sm:$0xff]
        %v880 = vld [vmem:[%s854 + $0xc8] sm:$0xff]
        %v881 = vld [vmem:[%s854 + $0xd0] sm:$0xff]
        %v882 = vld [vmem:[%s854 + $0xd8] sm:$0xff]
        %v883 = vld [vmem:[%s854 + $0xe0] sm:$0xff]
        %v884 = vld [vmem:[%s854 + $0xe8] sm:$0xff]
        %v885 = vld [vmem:[%s854 + $0xf0] sm:$0xff]
        %v886 = vld [vmem:[%s854 + $0xf8] sm:$0xff]
        %v887 = vld [vmem:[%s854 + $0x100] sm:$0xff]
        %v888 = vld [vmem:[%s854 + $0x108] sm:$0xff]
        %v889 = vld [vmem:[%s854 + $0x110] sm:$0xff]
        %v890 = vld [vmem:[%s854 + $0x118] sm:$0xff]
        %v891 = vld [vmem:[%s854 + $0x120] sm:$0xff]
        %v892 = vld [vmem:[%s854 + $0x128] sm:$0xff]
        %v893 = vld [vmem:[%s854 + $0x130] sm:$0xff]
        %v894 = vld [vmem:[%s854 + $0x138] sm:$0xff]
        %v895 = vld [vmem:[%s854 + $0x140] sm:$0xff]
        %v896 = vld [vmem:[%s854 + $0x148] sm:$0xff]
        %v897 = vld [vmem:[%s854 + $0x150] sm:$0xff]
        %v898 = vld [vmem:[%s854 + $0x158] sm:$0xff]
        %v899 = vld [vmem:[%s854 + $0x160] sm:$0xff]
        %v900 = vld [vmem:[%s854 + $0x168] sm:$0xff]
        %v901 = vld [vmem:[%s854 + $0x170] sm:$0xff]
        %v902 = vld [vmem:[%s854 + $0x178] sm:$0xff]
        %v903 = vld [vmem:[%s854 + $0x180] sm:$0xff]
        %v904 = vld [vmem:[%s854 + $0x188] sm:$0xff]
        %v905 = vld [vmem:[%s854 + $0x190] sm:$0xff]
        %v906 = vld [vmem:[%s854 + $0x198] sm:$0xff]
        %v907 = vld [vmem:[%s854 + $0x1a0] sm:$0xff]
        %v908 = vld [vmem:[%s854 + $0x1a8] sm:$0xff]
        %v909 = vld [vmem:[%s854 + $0x1b0] sm:$0xff]
        %v910 = vld [vmem:[%s854 + $0x1b8] sm:$0xff]
        %v911 = vld [vmem:[%s854 + $0x1c0] sm:$0xff]
        %v912 = vld [vmem:[%s854 + $0x1c8] sm:$0xff]
        %v913 = vld [vmem:[%s854 + $0x1d0] sm:$0xff]
        %v914 = vld [vmem:[%s854 + $0x1d8] sm:$0xff]
        %v915 = vld [vmem:[%s854 + $0x1e0] sm:$0xff]
        %v916 = vld [vmem:[%s854 + $0x1e8] sm:$0xff]
        %v917 = vld [vmem:[%s854 + $0x1f0] sm:$0xff]
        %v918 = vld [vmem:[%s854 + $0x1f8] sm:$0xff]
        %v919 = vlaneseq
        %v920 = vshrl.u32 %v919, 7
        %v921 = vadd.s32 %v920, 8
        %v922 = vadd.s32 %v920, 16
        %v923 = vadd.s32 %v920, 24
        %v924 = vadd.s32 %v920, 32
        %v925 = vadd.s32 %v920, 40
        %v926 = vadd.s32 %v920, 48
        %v927 = vadd.s32 %v920, 56
        %v928 = vadd.s32 %v920, 64
        %v929 = vadd.s32 %v920, 72
        %v930 = vadd.s32 %v920, 80
        %v931 = vadd.s32 %v920, 88
        %v932 = vadd.s32 %v920, 96
        %v933 = vadd.s32 %v920, 104
        %v934 = vadd.s32 %v920, 112
        %v935 = vadd.s32 %v920, 120
        %v936 = vadd.s32 %v920, 128
        %v937 = vadd.s32 %v920, 136
        %v938 = vadd.s32 %v920, 144
        %v939 = vadd.s32 %v920, 152
        %v940 = vadd.s32 %v920, 160
        %v941 = vadd.s32 %v920, 168
        %v942 = vadd.s32 %v920, 176
        %v943 = vadd.s32 %v920, 184
        %v944 = vadd.s32 %v920, 192
        %v945 = vadd.s32 %v920, 200
        %v946 = vadd.s32 %v920, 208
        %v947 = vadd.s32 %v920, 216
        %v948 = vadd.s32 %v920, 224
        %v949 = vadd.s32 %v920, 232
        %v950 = vadd.s32 %v920, 240
        %v951 = vadd.s32 %v920, 248
        %v952 = vadd.s32 %v920, 256
        %v953 = vadd.s32 %v920, 264
        %v954 = vadd.s32 %v920, 272
        %v955 = vadd.s32 %v920, 280
        %v956 = vadd.s32 %v920, 288
        %v957 = vadd.s32 %v920, 296
        %v958 = vadd.s32 %v920, 304
        %v959 = vadd.s32 %v920, 312
        %v960 = vadd.s32 %v920, 320
        %v961 = vadd.s32 %v920, 328
        %v962 = vadd.s32 %v920, 336
        %v963 = vadd.s32 %v920, 344
        %v964 = vadd.s32 %v920, 352
        %v965 = vadd.s32 %v920, 360
        %v966 = vadd.s32 %v920, 368
        %v967 = vadd.s32 %v920, 376
        %v968 = vadd.s32 %v920, 384
        %v969 = vadd.s32 %v920, 392
        %v970 = vadd.s32 %v920, 400
        %v971 = vadd.s32 %v920, 408
        %v972 = vadd.s32 %v920, 416
        %v973 = vadd.s32 %v920, 424
        %v974 = vadd.s32 %v920, 432
        %v975 = vadd.s32 %v920, 440
        %v976 = vadd.s32 %v920, 448
        %v977 = vadd.s32 %v920, 456
        %v978 = vadd.s32 %v920, 464
        %v979 = vadd.s32 %v920, 472
        %v980 = vadd.s32 %v920, 480
        %v981 = vadd.s32 %v920, 488
        %v982 = vadd.s32 %v920, 496
        %v983 = vadd.s32 %v920, 504
        %v984 = vstv %s347
        %v985 = vadd.s32 %v920, %v984
        %v986 = vadd.s32 %v921, %v984
        %v987 = vadd.s32 %v922, %v984
        %v988 = vadd.s32 %v923, %v984
        %v989 = vadd.s32 %v924, %v984
        %v990 = vadd.s32 %v925, %v984
        %v991 = vadd.s32 %v926, %v984
        %v992 = vadd.s32 %v927, %v984
        %v993 = vadd.s32 %v928, %v984
        %v994 = vadd.s32 %v929, %v984
        %v995 = vadd.s32 %v930, %v984
        %v996 = vadd.s32 %v931, %v984
        %v997 = vadd.s32 %v932, %v984
        %v998 = vadd.s32 %v933, %v984
        %v999 = vadd.s32 %v934, %v984
        %v1000 = vadd.s32 %v935, %v984
        %v1001 = vadd.s32 %v936, %v984
        %v1002 = vadd.s32 %v937, %v984
        %v1003 = vadd.s32 %v938, %v984
        %v1004 = vadd.s32 %v939, %v984
        %v1005 = vadd.s32 %v940, %v984
        %v1006 = vadd.s32 %v941, %v984
        %v1007 = vadd.s32 %v942, %v984
        %v1008 = vadd.s32 %v943, %v984
        %v1009 = vadd.s32 %v944, %v984
        %v1010 = vadd.s32 %v945, %v984
        %v1011 = vadd.s32 %v946, %v984
        %v1012 = vadd.s32 %v947, %v984
        %v1013 = vadd.s32 %v948, %v984
        %v1014 = vadd.s32 %v949, %v984
        %v1015 = vadd.s32 %v950, %v984
        %v1016 = vadd.s32 %v951, %v984
        %v1017 = vadd.s32 %v952, %v984
        %v1018 = vadd.s32 %v953, %v984
        %v1019 = vadd.s32 %v954, %v984
        %v1020 = vadd.s32 %v955, %v984
        %v1021 = vadd.s32 %v956, %v984
        %v1022 = vadd.s32 %v957, %v984
        %v1023 = vadd.s32 %v958, %v984
        %v1024 = vadd.s32 %v959, %v984
        %v1025 = vadd.s32 %v960, %v984
        %v1026 = vadd.s32 %v961, %v984
        %v1027 = vadd.s32 %v962, %v984
        %v1028 = vadd.s32 %v963, %v984
        %v1029 = vadd.s32 %v964, %v984
        %v1030 = vadd.s32 %v965, %v984
        %v1031 = vadd.s32 %v966, %v984
        %v1032 = vadd.s32 %v967, %v984
        %v1033 = vadd.s32 %v968, %v984
        %v1034 = vadd.s32 %v969, %v984
        %v1035 = vadd.s32 %v970, %v984
        %v1036 = vadd.s32 %v971, %v984
        %v1037 = vadd.s32 %v972, %v984
        %v1038 = vadd.s32 %v973, %v984
        %v1039 = vadd.s32 %v974, %v984
        %v1040 = vadd.s32 %v975, %v984
        %v1041 = vadd.s32 %v976, %v984
        %v1042 = vadd.s32 %v977, %v984
        %v1043 = vadd.s32 %v978, %v984
        %v1044 = vadd.s32 %v979, %v984
        %v1045 = vadd.s32 %v980, %v984
        %v1046 = vadd.s32 %v981, %v984
        %v1047 = vadd.s32 %v982, %v984
        %v1048 = vadd.s32 %v983, %v984
        %v1049 = vcvt.s32.f32 %v985
        %v1050 = vcvt.s32.f32 %v986
        %v1051 = vcvt.s32.f32 %v987
        %v1052 = vcvt.s32.f32 %v988
        %v1053 = vcvt.s32.f32 %v989
        %v1054 = vcvt.s32.f32 %v990
        %v1055 = vcvt.s32.f32 %v991
        %v1056 = vcvt.s32.f32 %v992
        %v1057 = vcvt.s32.f32 %v993
        %v1058 = vcvt.s32.f32 %v994
        %v1059 = vcvt.s32.f32 %v995
        %v1060 = vcvt.s32.f32 %v996
        %v1061 = vcvt.s32.f32 %v997
        %v1062 = vcvt.s32.f32 %v998
        %v1063 = vcvt.s32.f32 %v999
        %v1064 = vcvt.s32.f32 %v1000
        %v1065 = vcvt.s32.f32 %v1001
        %v1066 = vcvt.s32.f32 %v1002
        %v1067 = vcvt.s32.f32 %v1003
        %v1068 = vcvt.s32.f32 %v1004
        %v1069 = vcvt.s32.f32 %v1005
        %v1070 = vcvt.s32.f32 %v1006
        %v1071 = vcvt.s32.f32 %v1007
        %v1072 = vcvt.s32.f32 %v1008
        %v1073 = vcvt.s32.f32 %v1009
        %v1074 = vcvt.s32.f32 %v1010
        %v1075 = vcvt.s32.f32 %v1011
        %v1076 = vcvt.s32.f32 %v1012
        %v1077 = vcvt.s32.f32 %v1013
        %v1078 = vcvt.s32.f32 %v1014
        %v1079 = vcvt.s32.f32 %v1015
        %v1080 = vcvt.s32.f32 %v1016
        %v1081 = vcvt.s32.f32 %v1017
        %v1082 = vcvt.s32.f32 %v1018
        %v1083 = vcvt.s32.f32 %v1019
        %v1084 = vcvt.s32.f32 %v1020
        %v1085 = vcvt.s32.f32 %v1021
        %v1086 = vcvt.s32.f32 %v1022
        %v1087 = vcvt.s32.f32 %v1023
        %v1088 = vcvt.s32.f32 %v1024
        %v1089 = vcvt.s32.f32 %v1025
        %v1090 = vcvt.s32.f32 %v1026
        %v1091 = vcvt.s32.f32 %v1027
        %v1092 = vcvt.s32.f32 %v1028
        %v1093 = vcvt.s32.f32 %v1029
        %v1094 = vcvt.s32.f32 %v1030
        %v1095 = vcvt.s32.f32 %v1031
        %v1096 = vcvt.s32.f32 %v1032
        %v1097 = vcvt.s32.f32 %v1033
        %v1098 = vcvt.s32.f32 %v1034
        %v1099 = vcvt.s32.f32 %v1035
        %v1100 = vcvt.s32.f32 %v1036
        %v1101 = vcvt.s32.f32 %v1037
        %v1102 = vcvt.s32.f32 %v1038
        %v1103 = vcvt.s32.f32 %v1039
        %v1104 = vcvt.s32.f32 %v1040
        %v1105 = vcvt.s32.f32 %v1041
        %v1106 = vcvt.s32.f32 %v1042
        %v1107 = vcvt.s32.f32 %v1043
        %v1108 = vcvt.s32.f32 %v1044
        %v1109 = vcvt.s32.f32 %v1045
        %v1110 = vcvt.s32.f32 %v1046
        %v1111 = vcvt.s32.f32 %v1047
        %v1112 = vcvt.s32.f32 %v1048
        %v1113 = vld [vmem:[%s2] sm:$0x1]
        %v1114 = vlaneseq
        %v1115 = vshrl.u32 %v1114, 7
        %v1116 = vsub.s32 0, %v1115
        %v1117 = vrot.slane %v1113, %v1116
        %vm1118 = vcmp.ge.f32.partialorder %v1049, %v1117
        %vm1119 = vcmp.ge.f32.partialorder %v1050, %v1117
        %vm1120 = vcmp.ge.f32.partialorder %v1051, %v1117
        %vm1121 = vcmp.ge.f32.partialorder %v1052, %v1117
        %vm1122 = vcmp.ge.f32.partialorder %v1053, %v1117
        %vm1123 = vcmp.ge.f32.partialorder %v1054, %v1117
        %vm1124 = vcmp.ge.f32.partialorder %v1055, %v1117
        %vm1125 = vcmp.ge.f32.partialorder %v1056, %v1117
        %vm1126 = vcmp.ge.f32.partialorder %v1057, %v1117
        %vm1127 = vcmp.ge.f32.partialorder %v1058, %v1117
        %vm1128 = vcmp.ge.f32.partialorder %v1059, %v1117
        %vm1129 = vcmp.ge.f32.partialorder %v1060, %v1117
        %vm1130 = vcmp.ge.f32.partialorder %v1061, %v1117
        %vm1131 = vcmp.ge.f32.partialorder %v1062, %v1117
        %vm1132 = vcmp.ge.f32.partialorder %v1063, %v1117
        %vm1133 = vcmp.ge.f32.partialorder %v1064, %v1117
        %vm1134 = vcmp.ge.f32.partialorder %v1065, %v1117
        %vm1135 = vcmp.ge.f32.partialorder %v1066, %v1117
        %vm1136 = vcmp.ge.f32.partialorder %v1067, %v1117
        %vm1137 = vcmp.ge.f32.partialorder %v1068, %v1117
        %vm1138 = vcmp.ge.f32.partialorder %v1069, %v1117
        %vm1139 = vcmp.ge.f32.partialorder %v1070, %v1117
        %vm1140 = vcmp.ge.f32.partialorder %v1071, %v1117
        %vm1141 = vcmp.ge.f32.partialorder %v1072, %v1117
        %vm1142 = vcmp.ge.f32.partialorder %v1073, %v1117
        %vm1143 = vcmp.ge.f32.partialorder %v1074, %v1117
        %vm1144 = vcmp.ge.f32.partialorder %v1075, %v1117
        %vm1145 = vcmp.ge.f32.partialorder %v1076, %v1117
        %vm1146 = vcmp.ge.f32.partialorder %v1077, %v1117
        %vm1147 = vcmp.ge.f32.partialorder %v1078, %v1117
        %vm1148 = vcmp.ge.f32.partialorder %v1079, %v1117
        %vm1149 = vcmp.ge.f32.partialorder %v1080, %v1117
        %vm1150 = vcmp.ge.f32.partialorder %v1081, %v1117
        %vm1151 = vcmp.ge.f32.partialorder %v1082, %v1117
        %vm1152 = vcmp.ge.f32.partialorder %v1083, %v1117
        %vm1153 = vcmp.ge.f32.partialorder %v1084, %v1117
        %vm1154 = vcmp.ge.f32.partialorder %v1085, %v1117
        %vm1155 = vcmp.ge.f32.partialorder %v1086, %v1117
        %vm1156 = vcmp.ge.f32.partialorder %v1087, %v1117
        %vm1157 = vcmp.ge.f32.partialorder %v1088, %v1117
        %vm1158 = vcmp.ge.f32.partialorder %v1089, %v1117
        %vm1159 = vcmp.ge.f32.partialorder %v1090, %v1117
        %vm1160 = vcmp.ge.f32.partialorder %v1091, %v1117
        %vm1161 = vcmp.ge.f32.partialorder %v1092, %v1117
        %vm1162 = vcmp.ge.f32.partialorder %v1093, %v1117
        %vm1163 = vcmp.ge.f32.partialorder %v1094, %v1117
        %vm1164 = vcmp.ge.f32.partialorder %v1095, %v1117
        %vm1165 = vcmp.ge.f32.partialorder %v1096, %v1117
        %vm1166 = vcmp.ge.f32.partialorder %v1097, %v1117
        %vm1167 = vcmp.ge.f32.partialorder %v1098, %v1117
        %vm1168 = vcmp.ge.f32.partialorder %v1099, %v1117
        %vm1169 = vcmp.ge.f32.partialorder %v1100, %v1117
        %vm1170 = vcmp.ge.f32.partialorder %v1101, %v1117
        %vm1171 = vcmp.ge.f32.partialorder %v1102, %v1117
        %vm1172 = vcmp.ge.f32.partialorder %v1103, %v1117
        %vm1173 = vcmp.ge.f32.partialorder %v1104, %v1117
        %vm1174 = vcmp.ge.f32.partialorder %v1105, %v1117
        %vm1175 = vcmp.ge.f32.partialorder %v1106, %v1117
        %vm1176 = vcmp.ge.f32.partialorder %v1107, %v1117
        %vm1177 = vcmp.ge.f32.partialorder %v1108, %v1117
        %vm1178 = vcmp.ge.f32.partialorder %v1109, %v1117
        %vm1179 = vcmp.ge.f32.partialorder %v1110, %v1117
        %vm1180 = vcmp.ge.f32.partialorder %v1111, %v1117
        %vm1181 = vcmp.ge.f32.partialorder %v1112, %v1117
        %v1182 = vld [vmem:[%s2 + $0x1] sm:$0x1]
        %v1183 = vlaneseq
        %v1184 = vshrl.u32 %v1183, 7
        %v1185 = vsub.s32 0, %v1184
        %v1186 = vrot.slane %v1182, %v1185
        %vm1187 = vcmp.lt.f32.partialorder %v1049, %v1186
        %vm1188 = vcmp.lt.f32.partialorder %v1050, %v1186
        %vm1189 = vcmp.lt.f32.partialorder %v1051, %v1186
        %vm1190 = vcmp.lt.f32.partialorder %v1052, %v1186
        %vm1191 = vcmp.lt.f32.partialorder %v1053, %v1186
        %vm1192 = vcmp.lt.f32.partialorder %v1054, %v1186
        %vm1193 = vcmp.lt.f32.partialorder %v1055, %v1186
        %vm1194 = vcmp.lt.f32.partialorder %v1056, %v1186
        %vm1195 = vcmp.lt.f32.partialorder %v1057, %v1186
        %vm1196 = vcmp.lt.f32.partialorder %v1058, %v1186
        %vm1197 = vcmp.lt.f32.partialorder %v1059, %v1186
        %vm1198 = vcmp.lt.f32.partialorder %v1060, %v1186
        %vm1199 = vcmp.lt.f32.partialorder %v1061, %v1186
        %vm1200 = vcmp.lt.f32.partialorder %v1062, %v1186
        %vm1201 = vcmp.lt.f32.partialorder %v1063, %v1186
        %vm1202 = vcmp.lt.f32.partialorder %v1064, %v1186
        %vm1203 = vcmp.lt.f32.partialorder %v1065, %v1186
        %vm1204 = vcmp.lt.f32.partialorder %v1066, %v1186
        %vm1205 = vcmp.lt.f32.partialorder %v1067, %v1186
        %vm1206 = vcmp.lt.f32.partialorder %v1068, %v1186
        %vm1207 = vcmp.lt.f32.partialorder %v1069, %v1186
        %vm1208 = vcmp.lt.f32.partialorder %v1070, %v1186
        %vm1209 = vcmp.lt.f32.partialorder %v1071, %v1186
        %vm1210 = vcmp.lt.f32.partialorder %v1072, %v1186
        %vm1211 = vcmp.lt.f32.partialorder %v1073, %v1186
        %vm1212 = vcmp.lt.f32.partialorder %v1074, %v1186
        %vm1213 = vcmp.lt.f32.partialorder %v1075, %v1186
        %vm1214 = vcmp.lt.f32.partialorder %v1076, %v1186
        %vm1215 = vcmp.lt.f32.partialorder %v1077, %v1186
        %vm1216 = vcmp.lt.f32.partialorder %v1078, %v1186
        %vm1217 = vcmp.lt.f32.partialorder %v1079, %v1186
        %vm1218 = vcmp.lt.f32.partialorder %v1080, %v1186
        %vm1219 = vcmp.lt.f32.partialorder %v1081, %v1186
        %vm1220 = vcmp.lt.f32.partialorder %v1082, %v1186
        %vm1221 = vcmp.lt.f32.partialorder %v1083, %v1186
        %vm1222 = vcmp.lt.f32.partialorder %v1084, %v1186
        %vm1223 = vcmp.lt.f32.partialorder %v1085, %v1186
        %vm1224 = vcmp.lt.f32.partialorder %v1086, %v1186
        %vm1225 = vcmp.lt.f32.partialorder %v1087, %v1186
        %vm1226 = vcmp.lt.f32.partialorder %v1088, %v1186
        %vm1227 = vcmp.lt.f32.partialorder %v1089, %v1186
        %vm1228 = vcmp.lt.f32.partialorder %v1090, %v1186
        %vm1229 = vcmp.lt.f32.partialorder %v1091, %v1186
        %vm1230 = vcmp.lt.f32.partialorder %v1092, %v1186
        %vm1231 = vcmp.lt.f32.partialorder %v1093, %v1186
        %vm1232 = vcmp.lt.f32.partialorder %v1094, %v1186
        %vm1233 = vcmp.lt.f32.partialorder %v1095, %v1186
        %vm1234 = vcmp.lt.f32.partialorder %v1096, %v1186
        %vm1235 = vcmp.lt.f32.partialorder %v1097, %v1186
        %vm1236 = vcmp.lt.f32.partialorder %v1098, %v1186
        %vm1237 = vcmp.lt.f32.partialorder %v1099, %v1186
        %vm1238 = vcmp.lt.f32.partialorder %v1100, %v1186
        %vm1239 = vcmp.lt.f32.partialorder %v1101, %v1186
        %vm1240 = vcmp.lt.f32.partialorder %v1102, %v1186
        %vm1241 = vcmp.lt.f32.partialorder %v1103, %v1186
        %vm1242 = vcmp.lt.f32.partialorder %v1104, %v1186
        %vm1243 = vcmp.lt.f32.partialorder %v1105, %v1186
        %vm1244 = vcmp.lt.f32.partialorder %v1106, %v1186
        %vm1245 = vcmp.lt.f32.partialorder %v1107, %v1186
        %vm1246 = vcmp.lt.f32.partialorder %v1108, %v1186
        %vm1247 = vcmp.lt.f32.partialorder %v1109, %v1186
        %vm1248 = vcmp.lt.f32.partialorder %v1110, %v1186
        %vm1249 = vcmp.lt.f32.partialorder %v1111, %v1186
        %vm1250 = vcmp.lt.f32.partialorder %v1112, %v1186
        %vm1251 = vmand %vm1118, %vm1187
        %vm1252 = vmand %vm1119, %vm1188
        %vm1253 = vmand %vm1120, %vm1189
        %vm1254 = vmand %vm1121, %vm1190
        %vm1255 = vmand %vm1122, %vm1191
        %vm1256 = vmand %vm1123, %vm1192
        %vm1257 = vmand %vm1124, %vm1193
        %vm1258 = vmand %vm1125, %vm1194
        %vm1259 = vmand %vm1126, %vm1195
        %vm1260 = vmand %vm1127, %vm1196
        %vm1261 = vmand %vm1128, %vm1197
        %vm1262 = vmand %vm1129, %vm1198
        %vm1263 = vmand %vm1130, %vm1199
        %vm1264 = vmand %vm1131, %vm1200
        %vm1265 = vmand %vm1132, %vm1201
        %vm1266 = vmand %vm1133, %vm1202
        %vm1267 = vmand %vm1134, %vm1203
        %vm1268 = vmand %vm1135, %vm1204
        %vm1269 = vmand %vm1136, %vm1205
        %vm1270 = vmand %vm1137, %vm1206
        %vm1271 = vmand %vm1138, %vm1207
        %vm1272 = vmand %vm1139, %vm1208
        %vm1273 = vmand %vm1140, %vm1209
        %vm1274 = vmand %vm1141, %vm1210
        %vm1275 = vmand %vm1142, %vm1211
        %vm1276 = vmand %vm1143, %vm1212
        %vm1277 = vmand %vm1144, %vm1213
        %vm1278 = vmand %vm1145, %vm1214
        %vm1279 = vmand %vm1146, %vm1215
        %vm1280 = vmand %vm1147, %vm1216
        %vm1281 = vmand %vm1148, %vm1217
        %vm1282 = vmand %vm1149, %vm1218
        %vm1283 = vmand %vm1150, %vm1219
        %vm1284 = vmand %vm1151, %vm1220
        %vm1285 = vmand %vm1152, %vm1221
        %vm1286 = vmand %vm1153, %vm1222
        %vm1287 = vmand %vm1154, %vm1223
        %vm1288 = vmand %vm1155, %vm1224
        %vm1289 = vmand %vm1156, %vm1225
        %vm1290 = vmand %vm1157, %vm1226
        %vm1291 = vmand %vm1158, %vm1227
        %vm1292 = vmand %vm1159, %vm1228
        %vm1293 = vmand %vm1160, %vm1229
        %vm1294 = vmand %vm1161, %vm1230
        %vm1295 = vmand %vm1162, %vm1231
        %vm1296 = vmand %vm1163, %vm1232
        %vm1297 = vmand %vm1164, %vm1233
        %vm1298 = vmand %vm1165, %vm1234
        %vm1299 = vmand %vm1166, %vm1235
        %vm1300 = vmand %vm1167, %vm1236
        %vm1301 = vmand %vm1168, %vm1237
        %vm1302 = vmand %vm1169, %vm1238
        %vm1303 = vmand %vm1170, %vm1239
        %vm1304 = vmand %vm1171, %vm1240
        %vm1305 = vmand %vm1172, %vm1241
        %vm1306 = vmand %vm1173, %vm1242
        %vm1307 = vmand %vm1174, %vm1243
        %vm1308 = vmand %vm1175, %vm1244
        %vm1309 = vmand %vm1176, %vm1245
        %vm1310 = vmand %vm1177, %vm1246
        %vm1311 = vmand %vm1178, %vm1247
        %vm1312 = vmand %vm1179, %vm1248
        %vm1313 = vmand %vm1180, %vm1249
        %vm1314 = vmand %vm1181, %vm1250
        %v1315 = vsel %vm1251, 1, 0
        %v1316 = vsel %vm1252, 1, 0
        %v1317 = vsel %vm1253, 1, 0
        %v1318 = vsel %vm1254, 1, 0
        %v1319 = vsel %vm1255, 1, 0
        %v1320 = vsel %vm1256, 1, 0
        %v1321 = vsel %vm1257, 1, 0
        %v1322 = vsel %vm1258, 1, 0
        %v1323 = vsel %vm1259, 1, 0
        %v1324 = vsel %vm1260, 1, 0
        %v1325 = vsel %vm1261, 1, 0
        %v1326 = vsel %vm1262, 1, 0
        %v1327 = vsel %vm1263, 1, 0
        %v1328 = vsel %vm1264, 1, 0
        %v1329 = vsel %vm1265, 1, 0
        %v1330 = vsel %vm1266, 1, 0
        %v1331 = vsel %vm1267, 1, 0
        %v1332 = vsel %vm1268, 1, 0
        %v1333 = vsel %vm1269, 1, 0
        %v1334 = vsel %vm1270, 1, 0
        %v1335 = vsel %vm1271, 1, 0
        %v1336 = vsel %vm1272, 1, 0
        %v1337 = vsel %vm1273, 1, 0
        %v1338 = vsel %vm1274, 1, 0
        %v1339 = vsel %vm1275, 1, 0
        %v1340 = vsel %vm1276, 1, 0
        %v1341 = vsel %vm1277, 1, 0
        %v1342 = vsel %vm1278, 1, 0
        %v1343 = vsel %vm1279, 1, 0
        %v1344 = vsel %vm1280, 1, 0
        %v1345 = vsel %vm1281, 1, 0
        %v1346 = vsel %vm1282, 1, 0
        %v1347 = vsel %vm1283, 1, 0
        %v1348 = vsel %vm1284, 1, 0
        %v1349 = vsel %vm1285, 1, 0
        %v1350 = vsel %vm1286, 1, 0
        %v1351 = vsel %vm1287, 1, 0
        %v1352 = vsel %vm1288, 1, 0
        %v1353 = vsel %vm1289, 1, 0
        %v1354 = vsel %vm1290, 1, 0
        %v1355 = vsel %vm1291, 1, 0
        %v1356 = vsel %vm1292, 1, 0
        %v1357 = vsel %vm1293, 1, 0
        %v1358 = vsel %vm1294, 1, 0
        %v1359 = vsel %vm1295, 1, 0
        %v1360 = vsel %vm1296, 1, 0
        %v1361 = vsel %vm1297, 1, 0
        %v1362 = vsel %vm1298, 1, 0
        %v1363 = vsel %vm1299, 1, 0
        %v1364 = vsel %vm1300, 1, 0
        %v1365 = vsel %vm1301, 1, 0
        %v1366 = vsel %vm1302, 1, 0
        %v1367 = vsel %vm1303, 1, 0
        %v1368 = vsel %vm1304, 1, 0
        %v1369 = vsel %vm1305, 1, 0
        %v1370 = vsel %vm1306, 1, 0
        %v1371 = vsel %vm1307, 1, 0
        %v1372 = vsel %vm1308, 1, 0
        %v1373 = vsel %vm1309, 1, 0
        %v1374 = vsel %vm1310, 1, 0
        %v1375 = vsel %vm1311, 1, 0
        %v1376 = vsel %vm1312, 1, 0
        %v1377 = vsel %vm1313, 1, 0
        %v1378 = vsel %vm1314, 1, 0
        %v1379 = vcvt.s32.f32 %v1315
        %v1380 = vcvt.s32.f32 %v1316
        %v1381 = vcvt.s32.f32 %v1317
        %v1382 = vcvt.s32.f32 %v1318
        %v1383 = vcvt.s32.f32 %v1319
        %v1384 = vcvt.s32.f32 %v1320
        %v1385 = vcvt.s32.f32 %v1321
        %v1386 = vcvt.s32.f32 %v1322
        %v1387 = vcvt.s32.f32 %v1323
        %v1388 = vcvt.s32.f32 %v1324
        %v1389 = vcvt.s32.f32 %v1325
        %v1390 = vcvt.s32.f32 %v1326
        %v1391 = vcvt.s32.f32 %v1327
        %v1392 = vcvt.s32.f32 %v1328
        %v1393 = vcvt.s32.f32 %v1329
        %v1394 = vcvt.s32.f32 %v1330
        %v1395 = vcvt.s32.f32 %v1331
        %v1396 = vcvt.s32.f32 %v1332
        %v1397 = vcvt.s32.f32 %v1333
        %v1398 = vcvt.s32.f32 %v1334
        %v1399 = vcvt.s32.f32 %v1335
        %v1400 = vcvt.s32.f32 %v1336
        %v1401 = vcvt.s32.f32 %v1337
        %v1402 = vcvt.s32.f32 %v1338
        %v1403 = vcvt.s32.f32 %v1339
        %v1404 = vcvt.s32.f32 %v1340
        %v1405 = vcvt.s32.f32 %v1341
        %v1406 = vcvt.s32.f32 %v1342
        %v1407 = vcvt.s32.f32 %v1343
        %v1408 = vcvt.s32.f32 %v1344
        %v1409 = vcvt.s32.f32 %v1345
        %v1410 = vcvt.s32.f32 %v1346
        %v1411 = vcvt.s32.f32 %v1347
        %v1412 = vcvt.s32.f32 %v1348
        %v1413 = vcvt.s32.f32 %v1349
        %v1414 = vcvt.s32.f32 %v1350
        %v1415 = vcvt.s32.f32 %v1351
        %v1416 = vcvt.s32.f32 %v1352
        %v1417 = vcvt.s32.f32 %v1353
        %v1418 = vcvt.s32.f32 %v1354
        %v1419 = vcvt.s32.f32 %v1355
        %v1420 = vcvt.s32.f32 %v1356
        %v1421 = vcvt.s32.f32 %v1357
        %v1422 = vcvt.s32.f32 %v1358
        %v1423 = vcvt.s32.f32 %v1359
        %v1424 = vcvt.s32.f32 %v1360
        %v1425 = vcvt.s32.f32 %v1361
        %v1426 = vcvt.s32.f32 %v1362
        %v1427 = vcvt.s32.f32 %v1363
        %v1428 = vcvt.s32.f32 %v1364
        %v1429 = vcvt.s32.f32 %v1365
        %v1430 = vcvt.s32.f32 %v1366
        %v1431 = vcvt.s32.f32 %v1367
        %v1432 = vcvt.s32.f32 %v1368
        %v1433 = vcvt.s32.f32 %v1369
        %v1434 = vcvt.s32.f32 %v1370
        %v1435 = vcvt.s32.f32 %v1371
        %v1436 = vcvt.s32.f32 %v1372
        %v1437 = vcvt.s32.f32 %v1373
        %v1438 = vcvt.s32.f32 %v1374
        %v1439 = vcvt.s32.f32 %v1375
        %v1440 = vcvt.s32.f32 %v1376
        %v1441 = vcvt.s32.f32 %v1377
        %v1442 = vcvt.s32.f32 %v1378
        %v1443 = vld [vmem:[%s5] sm:$0xff]
        %v1444 = vld [vmem:[%s5 + $0x8] sm:$0xff]
        %v1445 = vld [vmem:[%s5 + $0x10] sm:$0xff]
        %v1446 = vld [vmem:[%s5 + $0x18] sm:$0xff]
        %v1447 = vld [vmem:[#allocation3] sm:$0xff]
        %vm1448 = vcmask 64512
        %v1450 = vsel %vm1448, %v1379, 0
        %v1453 = vsel %vm1448, %v1380, 0
        %v1456 = vsel %vm1448, %v1381, 0
        %v1459 = vsel %vm1448, %v1382, 0
        %v1462 = vsel %vm1448, %v1383, 0
        %v1465 = vsel %vm1448, %v1384, 0
        %v1468 = vsel %vm1448, %v1385, 0
        %v1471 = vsel %vm1448, %v1386, 0
        %v1474 = vsel %vm1448, %v1387, 0
        %v1477 = vsel %vm1448, %v1388, 0
        %v1480 = vsel %vm1448, %v1389, 0
        %v1483 = vsel %vm1448, %v1390, 0
        %v1486 = vsel %vm1448, %v1391, 0
        %v1489 = vsel %vm1448, %v1392, 0
        %v1492 = vsel %vm1448, %v1393, 0
        %v1495 = vsel %vm1448, %v1394, 0
        %v1498 = vsel %vm1448, %v1395, 0
        %v1501 = vsel %vm1448, %v1396, 0
        %v1504 = vsel %vm1448, %v1397, 0
        %v1507 = vsel %vm1448, %v1398, 0
        %v1510 = vsel %vm1448, %v1399, 0
        %v1513 = vsel %vm1448, %v1400, 0
        %v1516 = vsel %vm1448, %v1401, 0
        %v1519 = vsel %vm1448, %v1402, 0
        %v1522 = vsel %vm1448, %v1403, 0
        %v1525 = vsel %vm1448, %v1404, 0
        %v1528 = vsel %vm1448, %v1405, 0
        %v1531 = vsel %vm1448, %v1406, 0
        %v1534 = vsel %vm1448, %v1407, 0
        %v1537 = vsel %vm1448, %v1408, 0
        %v1540 = vsel %vm1448, %v1409, 0
        %v1543 = vsel %vm1448, %v1410, 0
        %v1546 = vsel %vm1448, %v1411, 0
        %v1549 = vsel %vm1448, %v1412, 0
        %v1552 = vsel %vm1448, %v1413, 0
        %v1555 = vsel %vm1448, %v1414, 0
        %v1558 = vsel %vm1448, %v1415, 0
        %v1561 = vsel %vm1448, %v1416, 0
        %v1564 = vsel %vm1448, %v1417, 0
        %v1567 = vsel %vm1448, %v1418, 0
        %v1570 = vsel %vm1448, %v1419, 0
        %v1573 = vsel %vm1448, %v1420, 0
        %v1576 = vsel %vm1448, %v1421, 0
        %v1579 = vsel %vm1448, %v1422, 0
        %v1582 = vsel %vm1448, %v1423, 0
        %v1585 = vsel %vm1448, %v1424, 0
        %v1588 = vsel %vm1448, %v1425, 0
        %v1591 = vsel %vm1448, %v1426, 0
        %v1594 = vsel %vm1448, %v1427, 0
        %v1597 = vsel %vm1448, %v1428, 0
        %v1600 = vsel %vm1448, %v1429, 0
        %v1603 = vsel %vm1448, %v1430, 0
        %v1606 = vsel %vm1448, %v1431, 0
        %v1609 = vsel %vm1448, %v1432, 0
        %v1612 = vsel %vm1448, %v1433, 0
        %v1615 = vsel %vm1448, %v1434, 0
        %v1618 = vsel %vm1448, %v1435, 0
        %v1621 = vsel %vm1448, %v1436, 0
        %v1624 = vsel %vm1448, %v1437, 0
        %v1627 = vsel %vm1448, %v1438, 0
        %v1630 = vsel %vm1448, %v1439, 0
        %v1633 = vsel %vm1448, %v1440, 0
        %v1636 = vsel %vm1448, %v1441, 0
        %v1639 = vsel %vm1448, %v1442, 0
        %1641 = vmatprep.subr.mxu0 0.0
        %1642 = vmatpush1.msra.mxu0 %v1447
        %1643 = vmatprep.subr.mxu0 0.0
        %1644 = vmatpush1.msra.mxu0 0.0
        %1645 = vmatprep.subr.mxu0 0.0
        %1646 = vmatpush1.msra.mxu0 0.0
        %1647 = vmatprep.subr.mxu0 0.0
        %1648 = vmatpush1.msra.mxu0 0.0
        %1649 = vmatprep.subr.mxu0 0.0
        %1650 = vmatpush1.msra.mxu0 0.0
        %1651 = vmatprep.subr.mxu0 0.0
        %1652 = vmatpush1.msra.mxu0 0.0
        %1653 = vmatprep.subr.mxu0 0.0
        %1654 = vmatpush1.msra.mxu0 0.0
        %1655 = vmatprep.subr.mxu0 0.0
        %1656 = vmatpush1.msra.mxu0 0.0
        %1657 = vmatprep.subr.mxu0 0.0
        %1658 = vmatpush1.msra.mxu0 0.0
        %1659 = vmatprep.subr.mxu0 0.0
        %1660 = vmatpush1.msra.mxu0 0.0
        %1661 = vmatprep.subr.mxu0 0.0
        %1662 = vmatpush1.msra.mxu0 0.0
        %1663 = vmatprep.subr.mxu0 0.0
        %1664 = vmatpush1.msra.mxu0 0.0
        %1665 = vmatprep.subr.mxu0 0.0
        %1666 = vmatpush1.msra.mxu0 0.0
        %1667 = vmatprep.subr.mxu0 0.0
        %1668 = vmatpush1.msra.mxu0 0.0
        %1669 = vmatprep.subr.mxu0 0.0
        %1670 = vmatpush1.msra.mxu0 0.0
        %1671 = vmatprep.subr.mxu0 0.0
        %1672 = vmatpush1.msra.mxu0 0.0
        %1673 = vmatprep.subr.mxu0 0.0
        %1674 = vmatpush1.msra.mxu0 0.0
        %1675 = vmatprep.subr.mxu0 0.0
        %1676 = vmatpush1.msra.mxu0 0.0
        %1677 = vmatprep.subr.mxu0 0.0
        %1678 = vmatpush1.msra.mxu0 0.0
        %1679 = vmatprep.subr.mxu0 0.0
        %1680 = vmatpush1.msra.mxu0 0.0
        %1681 = vmatprep.subr.mxu0 0.0
        %1682 = vmatpush1.msra.mxu0 0.0
        %1683 = vmatprep.subr.mxu0 0.0
        %1684 = vmatpush1.msra.mxu0 0.0
        %1685 = vmatprep.subr.mxu0 0.0
        %1686 = vmatpush1.msra.mxu0 0.0
        %1687 = vmatprep.subr.mxu0 0.0
        %1688 = vmatpush1.msra.mxu0 0.0
        %1689 = vmatprep.subr.mxu0 0.0
        %1690 = vmatpush1.msra.mxu0 0.0
        %1691 = vmatprep.subr.mxu0 0.0
        %1692 = vmatpush1.msra.mxu0 0.0
        %1693 = vmatprep.subr.mxu0 0.0
        %1694 = vmatpush1.msra.mxu0 0.0
        %1695 = vmatprep.subr.mxu0 0.0
        %1696 = vmatpush1.msra.mxu0 0.0
        %1697 = vmatprep.subr.mxu0 0.0
        %1698 = vmatpush1.msra.mxu0 0.0
        %1699 = vmatprep.subr.mxu0 0.0
        %1700 = vmatpush1.msra.mxu0 0.0
        %1701 = vmatprep.subr.mxu0 0.0
        %1702 = vmatpush1.msra.mxu0 0.0
        %1703 = vmatprep.subr.mxu0 0.0
        %1704 = vmatpush1.msra.mxu0 0.0
        %1705 = vmatprep.mubr.f32.mxu0 0.0
        %1706 = vmatmul.mubr.f32.gmra.mrb[0].mxu0 %v1450
        %v1707 = vpop.f32.mrb[0].mxu0
        %v1708 = vadd.f32 0.0, %v1707
        %v1709 = vpop.f32.mrb[0].mxu0
        %1710 = vmatprep.mubr.f32.mxu0 0.0
        %1711 = vmatmul.mubr.f32.gmra.mrb[0].mxu0 %v1453
        %v1712 = vpop.f32.mrb[0].mxu0
        %v1713 = vadd.f32 0.0, %v1712
        %v1714 = vpop.f32.mrb[0].mxu0
        %1715 = vmatprep.mubr.f32.mxu0 0.0
        %1716 = vmatmul.mubr.f32.gmra.mrb[0].mxu0 %v1456
        %v1717 = vpop.f32.mrb[0].mxu0
        %v1718 = vadd.f32 0.0, %v1717
        %v1719 = vpop.f32.mrb[0].mxu0
        %1720 = vmatprep.mubr.f32.mxu0 0.0
        %1721 = vmatmul.mubr.f32.gmra.mrb[0].mxu0 %v1459
        %v1722 = vpop.f32.mrb[0].mxu0
        %v1723 = vadd.f32 0.0, %v1722
        %v1724 = vpop.f32.mrb[0].mxu0
        %1725 = vmatprep.mubr.f32.mxu0 0.0
        %1726 = vmatmul.mubr.f32.gmra.mrb[0].mxu0 %v1462
        %v1727 = vpop.f32.mrb[0].mxu0
        %v1728 = vadd.f32 0.0, %v1727
        %v1729 = vpop.f32.mrb[0].mxu0
        %1730 = vmatprep.mubr.f32.mxu0 0.0
        %1731 = vmatmul.mubr.f32.gmra.mrb[0].mxu0 %v1465
        %v1732 = vpop.f32.mrb[0].mxu0
        %v1733 = vadd.f32 0.0, %v1732
        %v1734 = vpop.f32.mrb[0].mxu0
        %1735 = vmatprep.mubr.f32.mxu0 0.0
        %1736 = vmatmul.mubr.f32.gmra.mrb[0].mxu0 %v1468
        %v1737 = vpop.f32.mrb[0].mxu0
        %v1738 = vadd.f32 0.0, %v1737
        %v1739 = vpop.f32.mrb[0].mxu0
        %1740 = vmatprep.mubr.f32.mxu0 0.0
        %1741 = vmatmul.mubr.f32.gmra.mrb[0].mxu0 %v1471
        %v1742 = vpop.f32.mrb[0].mxu0
        %v1743 = vadd.f32 0.0, %v1742
        %v1744 = vpop.f32.mrb[0].mxu0
        %1745 = vmatprep.mubr.f32.mxu0 0.0
        %1746 = vmatmul.mubr.f32.gmra.mrb[0].mxu0 %v1474
        %v1747 = vpop.f32.mrb[0].mxu0
        %v1748 = vadd.f32 0.0, %v1747
        %v1749 = vpop.f32.mrb[0].mxu0
        %1750 = vmatprep.mubr.f32.mxu0 0.0
        %1751 = vmatmul.mubr.f32.gmra.mrb[0].mxu0 %v1477
        %v1752 = vpop.f32.mrb[0].mxu0
        %v1753 = vadd.f32 0.0, %v1752
        %v1754 = vpop.f32.mrb[0].mxu0
        %1755 = vmatprep.mubr.f32.mxu0 0.0
        %1756 = vmatmul.mubr.f32.gmra.mrb[0].mxu0 %v1480
        %v1757 = vpop.f32.mrb[0].mxu0
        %v1758 = vadd.f32 0.0, %v1757
        %v1759 = vpop.f32.mrb[0].mxu0
        %1760 = vmatprep.mubr.f32.mxu0 0.0
        %1761 = vmatmul.mubr.f32.gmra.mrb[0].mxu0 %v1483
        %v1762 = vpop.f32.mrb[0].mxu0
        %v1763 = vadd.f32 0.0, %v1762
        %v1764 = vpop.f32.mrb[0].mxu0
        %1765 = vmatprep.mubr.f32.mxu0 0.0
        %1766 = vmatmul.mubr.f32.gmra.mrb[0].mxu0 %v1486
        %v1767 = vpop.f32.mrb[0].mxu0
        %v1768 = vadd.f32 0.0, %v1767
        %v1769 = vpop.f32.mrb[0].mxu0
        %1770 = vmatprep.mubr.f32.mxu0 0.0
        %1771 = vmatmul.mubr.f32.gmra.mrb[0].mxu0 %v1489
        %v1772 = vpop.f32.mrb[0].mxu0
        %v1773 = vadd.f32 0.0, %v1772
        %v1774 = vpop.f32.mrb[0].mxu0
        %1775 = vmatprep.mubr.f32.mxu0 0.0
        %1776 = vmatmul.mubr.f32.gmra.mrb[0].mxu0 %v1492
        %v1777 = vpop.f32.mrb[0].mxu0
        %v1778 = vadd.f32 0.0, %v1777
        %v1779 = vpop.f32.mrb[0].mxu0
        %1780 = vmatprep.mubr.f32.mxu0 0.0
        %1781 = vmatmul.mubr.f32.gmra.mrb[0].mxu0 %v1495
        %v1782 = vpop.f32.mrb[0].mxu0
        %v1783 = vadd.f32 0.0, %v1782
        %v1784 = vpop.f32.mrb[0].mxu0
        %1785 = vmatprep.mubr.f32.mxu0 0.0
        %1786 = vmatmul.mubr.f32.gmra.mrb[0].mxu0 %v1498
        %v1787 = vpop.f32.mrb[0].mxu0
        %v1788 = vadd.f32 0.0, %v1787
        %v1789 = vpop.f32.mrb[0].mxu0
        %1790 = vmatprep.mubr.f32.mxu0 0.0
        %1791 = vmatmul.mubr.f32.gmra.mrb[0].mxu0 %v1501
        %v1792 = vpop.f32.mrb[0].mxu0
        %v1793 = vadd.f32 0.0, %v1792
        %v1794 = vpop.f32.mrb[0].mxu0
        %1795 = vmatprep.mubr.f32.mxu0 0.0
        %1796 = vmatmul.mubr.f32.gmra.mrb[0].mxu0 %v1504
        %v1797 = vpop.f32.mrb[0].mxu0
        %v1798 = vadd.f32 0.0, %v1797
        %v1799 = vpop.f32.mrb[0].mxu0
        %1800 = vmatprep.mubr.f32.mxu0 0.0
        %1801 = vmatmul.mubr.f32.gmra.mrb[0].mxu0 %v1507
        %v1802 = vpop.f32.mrb[0].mxu0
        %v1803 = vadd.f32 0.0, %v1802
        %v1804 = vpop.f32.mrb[0].mxu0
        %1805 = vmatprep.mubr.f32.mxu0 0.0
        %1806 = vmatmul.mubr.f32.gmra.mrb[0].mxu0 %v1510
        %v1807 = vpop.f32.mrb[0].mxu0
        %v1808 = vadd.f32 0.0, %v1807
        %v1809 = vpop.f32.mrb[0].mxu0
        %1810 = vmatprep.mubr.f32.mxu0 0.0
        %1811 = vmatmul.mubr.f32.gmra.mrb[0].mxu0 %v1513
        %v1812 = vpop.f32.mrb[0].mxu0
        %v1813 = vadd.f32 0.0, %v1812
        %v1814 = vpop.f32.mrb[0].mxu0
        %1815 = vmatprep.mubr.f32.mxu0 0.0
        %1816 = vmatmul.mubr.f32.gmra.mrb[0].mxu0 %v1516
        %v1817 = vpop.f32.mrb[0].mxu0
        %v1818 = vadd.f32 0.0, %v1817
        %v1819 = vpop.f32.mrb[0].mxu0
        %1820 = vmatprep.mubr.f32.mxu0 0.0
        %1821 = vmatmul.mubr.f32.gmra.mrb[0].mxu0 %v1519
        %v1822 = vpop.f32.mrb[0].mxu0
        %v1823 = vadd.f32 0.0, %v1822
        %v1824 = vpop.f32.mrb[0].mxu0
        %1825 = vmatprep.mubr.f32.mxu0 0.0
        %1826 = vmatmul.mubr.f32.gmra.mrb[0].mxu0 %v1522
        %v1827 = vpop.f32.mrb[0].mxu0
        %v1828 = vadd.f32 0.0, %v1827
        %v1829 = vpop.f32.mrb[0].mxu0
        %1830 = vmatprep.mubr.f32.mxu0 0.0
        %1831 = vmatmul.mubr.f32.gmra.mrb[0].mxu0 %v1525
        %v1832 = vpop.f32.mrb[0].mxu0
        %v1833 = vadd.f32 0.0, %v1832
        %v1834 = vpop.f32.mrb[0].mxu0
        %1835 = vmatprep.mubr.f32.mxu0 0.0
        %1836 = vmatmul.mubr.f32.gmra.mrb[0].mxu0 %v1528
        %v1837 = vpop.f32.mrb[0].mxu0
        %v1838 = vadd.f32 0.0, %v1837
        %v1839 = vpop.f32.mrb[0].mxu0
        %1840 = vmatprep.mubr.f32.mxu0 0.0
        %1841 = vmatmul.mubr.f32.gmra.mrb[0].mxu0 %v1531
        %v1842 = vpop.f32.mrb[0].mxu0
        %v1843 = vadd.f32 0.0, %v1842
        %v1844 = vpop.f32.mrb[0].mxu0
        %1845 = vmatprep.mubr.f32.mxu0 0.0
        %1846 = vmatmul.mubr.f32.gmra.mrb[0].mxu0 %v1534
        %v1847 = vpop.f32.mrb[0].mxu0
        %v1848 = vadd.f32 0.0, %v1847
        %v1849 = vpop.f32.mrb[0].mxu0
        %1850 = vmatprep.mubr.f32.mxu0 0.0
        %1851 = vmatmul.mubr.f32.gmra.mrb[0].mxu0 %v1537
        %v1852 = vpop.f32.mrb[0].mxu0
        %v1853 = vadd.f32 0.0, %v1852
        %v1854 = vpop.f32.mrb[0].mxu0
        %1855 = vmatprep.mubr.f32.mxu0 0.0
        %1856 = vmatmul.mubr.f32.gmra.mrb[0].mxu0 %v1540
        %v1857 = vpop.f32.mrb[0].mxu0
        %v1858 = vadd.f32 0.0, %v1857
        %v1859 = vpop.f32.mrb[0].mxu0
        %1860 = vmatprep.mubr.f32.mxu0 0.0
        %1861 = vmatmul.mubr.f32.gmra.mrb[0].mxu0 %v1543
        %v1862 = vpop.f32.mrb[0].mxu0
        %v1863 = vadd.f32 0.0, %v1862
        %v1864 = vpop.f32.mrb[0].mxu0
        %1865 = vmatprep.mubr.f32.mxu0 0.0
        %1866 = vmatmul.mubr.f32.gmra.mrb[0].mxu0 %v1546
        %v1867 = vpop.f32.mrb[0].mxu0
        %v1868 = vadd.f32 0.0, %v1867
        %v1869 = vpop.f32.mrb[0].mxu0
        %1870 = vmatprep.mubr.f32.mxu0 0.0
        %1871 = vmatmul.mubr.f32.gmra.mrb[0].mxu0 %v1549
        %v1872 = vpop.f32.mrb[0].mxu0
        %v1873 = vadd.f32 0.0, %v1872
        %v1874 = vpop.f32.mrb[0].mxu0
        %1875 = vmatprep.mubr.f32.mxu0 0.0
        %1876 = vmatmul.mubr.f32.gmra.mrb[0].mxu0 %v1552
        %v1877 = vpop.f32.mrb[0].mxu0
        %v1878 = vadd.f32 0.0, %v1877
        %v1879 = vpop.f32.mrb[0].mxu0
        %1880 = vmatprep.mubr.f32.mxu0 0.0
        %1881 = vmatmul.mubr.f32.gmra.mrb[0].mxu0 %v1555
        %v1882 = vpop.f32.mrb[0].mxu0
        %v1883 = vadd.f32 0.0, %v1882
        %v1884 = vpop.f32.mrb[0].mxu0
        %1885 = vmatprep.mubr.f32.mxu0 0.0
        %1886 = vmatmul.mubr.f32.gmra.mrb[0].mxu0 %v1558
        %v1887 = vpop.f32.mrb[0].mxu0
        %v1888 = vadd.f32 0.0, %v1887
        %v1889 = vpop.f32.mrb[0].mxu0
        %1890 = vmatprep.mubr.f32.mxu0 0.0
        %1891 = vmatmul.mubr.f32.gmra.mrb[0].mxu0 %v1561
        %v1892 = vpop.f32.mrb[0].mxu0
        %v1893 = vadd.f32 0.0, %v1892
        %v1894 = vpop.f32.mrb[0].mxu0
        %1895 = vmatprep.mubr.f32.mxu0 0.0
        %1896 = vmatmul.mubr.f32.gmra.mrb[0].mxu0 %v1564
        %v1897 = vpop.f32.mrb[0].mxu0
        %v1898 = vadd.f32 0.0, %v1897
        %v1899 = vpop.f32.mrb[0].mxu0
        %1900 = vmatprep.mubr.f32.mxu0 0.0
        %1901 = vmatmul.mubr.f32.gmra.mrb[0].mxu0 %v1567
        %v1902 = vpop.f32.mrb[0].mxu0
        %v1903 = vadd.f32 0.0, %v1902
        %v1904 = vpop.f32.mrb[0].mxu0
        %1905 = vmatprep.mubr.f32.mxu0 0.0
        %1906 = vmatmul.mubr.f32.gmra.mrb[0].mxu0 %v1570
        %v1907 = vpop.f32.mrb[0].mxu0
        %v1908 = vadd.f32 0.0, %v1907
        %v1909 = vpop.f32.mrb[0].mxu0
        %1910 = vmatprep.mubr.f32.mxu0 0.0
        %1911 = vmatmul.mubr.f32.gmra.mrb[0].mxu0 %v1573
        %v1912 = vpop.f32.mrb[0].mxu0
        %v1913 = vadd.f32 0.0, %v1912
        %v1914 = vpop.f32.mrb[0].mxu0
        %1915 = vmatprep.mubr.f32.mxu0 0.0
        %1916 = vmatmul.mubr.f32.gmra.mrb[0].mxu0 %v1576
        %v1917 = vpop.f32.mrb[0].mxu0
        %v1918 = vadd.f32 0.0, %v1917
        %v1919 = vpop.f32.mrb[0].mxu0
        %1920 = vmatprep.mubr.f32.mxu0 0.0
        %1921 = vmatmul.mubr.f32.gmra.mrb[0].mxu0 %v1579
        %v1922 = vpop.f32.mrb[0].mxu0
        %v1923 = vadd.f32 0.0, %v1922
        %v1924 = vpop.f32.mrb[0].mxu0
        %1925 = vmatprep.mubr.f32.mxu0 0.0
        %1926 = vmatmul.mubr.f32.gmra.mrb[0].mxu0 %v1582
        %v1927 = vpop.f32.mrb[0].mxu0
        %v1928 = vadd.f32 0.0, %v1927
        %v1929 = vpop.f32.mrb[0].mxu0
        %1930 = vmatprep.mubr.f32.mxu0 0.0
        %1931 = vmatmul.mubr.f32.gmra.mrb[0].mxu0 %v1585
        %v1932 = vpop.f32.mrb[0].mxu0
        %v1933 = vadd.f32 0.0, %v1932
        %v1934 = vpop.f32.mrb[0].mxu0
        %1935 = vmatprep.mubr.f32.mxu0 0.0
        %1936 = vmatmul.mubr.f32.gmra.mrb[0].mxu0 %v1588
        %v1937 = vpop.f32.mrb[0].mxu0
        %v1938 = vadd.f32 0.0, %v1937
        %v1939 = vpop.f32.mrb[0].mxu0
        %1940 = vmatprep.mubr.f32.mxu0 0.0
        %1941 = vmatmul.mubr.f32.gmra.mrb[0].mxu0 %v1591
        %v1942 = vpop.f32.mrb[0].mxu0
        %v1943 = vadd.f32 0.0, %v1942
        %v1944 = vpop.f32.mrb[0].mxu0
        %1945 = vmatprep.mubr.f32.mxu0 0.0
        %1946 = vmatmul.mubr.f32.gmra.mrb[0].mxu0 %v1594
        %v1947 = vpop.f32.mrb[0].mxu0
        %v1948 = vadd.f32 0.0, %v1947
        %v1949 = vpop.f32.mrb[0].mxu0
        %1950 = vmatprep.mubr.f32.mxu0 0.0
        %1951 = vmatmul.mubr.f32.gmra.mrb[0].mxu0 %v1597
        %v1952 = vpop.f32.mrb[0].mxu0
        %v1953 = vadd.f32 0.0, %v1952
        %v1954 = vpop.f32.mrb[0].mxu0
        %1955 = vmatprep.mubr.f32.mxu0 0.0
        %1956 = vmatmul.mubr.f32.gmra.mrb[0].mxu0 %v1600
        %v1957 = vpop.f32.mrb[0].mxu0
        %v1958 = vadd.f32 0.0, %v1957
        %v1959 = vpop.f32.mrb[0].mxu0
        %1960 = vmatprep.mubr.f32.mxu0 0.0
        %1961 = vmatmul.mubr.f32.gmra.mrb[0].mxu0 %v1603
        %v1962 = vpop.f32.mrb[0].mxu0
        %v1963 = vadd.f32 0.0, %v1962
        %v1964 = vpop.f32.mrb[0].mxu0
        %1965 = vmatprep.mubr.f32.mxu0 0.0
        %1966 = vmatmul.mubr.f32.gmra.mrb[0].mxu0 %v1606
        %v1967 = vpop.f32.mrb[0].mxu0
        %v1968 = vadd.f32 0.0, %v1967
        %v1969 = vpop.f32.mrb[0].mxu0
        %1970 = vmatprep.mubr.f32.mxu0 0.0
        %1971 = vmatmul.mubr.f32.gmra.mrb[0].mxu0 %v1609
        %v1972 = vpop.f32.mrb[0].mxu0
        %v1973 = vadd.f32 0.0, %v1972
        %v1974 = vpop.f32.mrb[0].mxu0
        %1975 = vmatprep.mubr.f32.mxu0 0.0
        %1976 = vmatmul.mubr.f32.gmra.mrb[0].mxu0 %v1612
        %v1977 = vpop.f32.mrb[0].mxu0
        %v1978 = vadd.f32 0.0, %v1977
        %v1979 = vpop.f32.mrb[0].mxu0
        %1980 = vmatprep.mubr.f32.mxu0 0.0
        %1981 = vmatmul.mubr.f32.gmra.mrb[0].mxu0 %v1615
        %v1982 = vpop.f32.mrb[0].mxu0
        %v1983 = vadd.f32 0.0, %v1982
        %v1984 = vpop.f32.mrb[0].mxu0
        %1985 = vmatprep.mubr.f32.mxu0 0.0
        %1986 = vmatmul.mubr.f32.gmra.mrb[0].mxu0 %v1618
        %v1987 = vpop.f32.mrb[0].mxu0
        %v1988 = vadd.f32 0.0, %v1987
        %v1989 = vpop.f32.mrb[0].mxu0
        %1990 = vmatprep.mubr.f32.mxu0 0.0
        %1991 = vmatmul.mubr.f32.gmra.mrb[0].mxu0 %v1621
        %v1992 = vpop.f32.mrb[0].mxu0
        %v1993 = vadd.f32 0.0, %v1992
        %v1994 = vpop.f32.mrb[0].mxu0
        %1995 = vmatprep.mubr.f32.mxu0 0.0
        %1996 = vmatmul.mubr.f32.gmra.mrb[0].mxu0 %v1624
        %v1997 = vpop.f32.mrb[0].mxu0
        %v1998 = vadd.f32 0.0, %v1997
        %v1999 = vpop.f32.mrb[0].mxu0
        %2000 = vmatprep.mubr.f32.mxu0 0.0
        %2001 = vmatmul.mubr.f32.gmra.mrb[0].mxu0 %v1627
        %v2002 = vpop.f32.mrb[0].mxu0
        %v2003 = vadd.f32 0.0, %v2002
        %v2004 = vpop.f32.mrb[0].mxu0
        %2005 = vmatprep.mubr.f32.mxu0 0.0
        %2006 = vmatmul.mubr.f32.gmra.mrb[0].mxu0 %v1630
        %v2007 = vpop.f32.mrb[0].mxu0
        %v2008 = vadd.f32 0.0, %v2007
        %v2009 = vpop.f32.mrb[0].mxu0
        %2010 = vmatprep.mubr.f32.mxu0 0.0
        %2011 = vmatmul.mubr.f32.gmra.mrb[0].mxu0 %v1633
        %v2012 = vpop.f32.mrb[0].mxu0
        %v2013 = vadd.f32 0.0, %v2012
        %v2014 = vpop.f32.mrb[0].mxu0
        %2015 = vmatprep.mubr.f32.mxu0 0.0
        %2016 = vmatmul.mubr.f32.gmra.mrb[0].mxu0 %v1636
        %v2017 = vpop.f32.mrb[0].mxu0
        %v2018 = vadd.f32 0.0, %v2017
        %v2019 = vpop.f32.mrb[0].mxu0
        %2020 = vmatprep.mubr.f32.mxu0 0.0
        %2021 = vmatmul.mubr.f32.gmra.mrb[0].mxu0 %v1639
        %v2022 = vpop.f32.mrb[0].mxu0
        %v2023 = vadd.f32 0.0, %v2022
        %v2024 = vpop.f32.mrb[0].mxu0
        %2025 = vdwg.mxu0
        %vm2026 = vcmask 261120
        %v2028 = vsel %vm2026, %v855, 0
        %v2031 = vsel %vm2026, %v856, 0
        %v2034 = vsel %vm2026, %v857, 0
        %v2037 = vsel %vm2026, %v858, 0
        %v2040 = vsel %vm2026, %v859, 0
        %v2043 = vsel %vm2026, %v860, 0
        %v2046 = vsel %vm2026, %v861, 0
        %v2049 = vsel %vm2026, %v862, 0
        %v2052 = vsel %vm2026, %v863, 0
        %v2055 = vsel %vm2026, %v864, 0
        %v2058 = vsel %vm2026, %v865, 0
        %v2061 = vsel %vm2026, %v866, 0
        %v2064 = vsel %vm2026, %v867, 0
        %v2067 = vsel %vm2026, %v868, 0
        %v2070 = vsel %vm2026, %v869, 0
        %v2073 = vsel %vm2026, %v870, 0
        %v2076 = vsel %vm2026, %v871, 0
        %v2079 = vsel %vm2026, %v872, 0
        %v2082 = vsel %vm2026, %v873, 0
        %v2085 = vsel %vm2026, %v874, 0
        %v2088 = vsel %vm2026, %v875, 0
        %v2091 = vsel %vm2026, %v876, 0
        %v2094 = vsel %vm2026, %v877, 0
        %v2097 = vsel %vm2026, %v878, 0
        %v2100 = vsel %vm2026, %v879, 0
        %v2103 = vsel %vm2026, %v880, 0
        %v2106 = vsel %vm2026, %v881, 0
        %v2109 = vsel %vm2026, %v882, 0
        %v2112 = vsel %vm2026, %v883, 0
        %v2115 = vsel %vm2026, %v884, 0
        %v2118 = vsel %vm2026, %v885, 0
        %v2121 = vsel %vm2026, %v886, 0
        %v2124 = vsel %vm2026, %v887, 0
        %v2127 = vsel %vm2026, %v888, 0
        %v2130 = vsel %vm2026, %v889, 0
        %v2133 = vsel %vm2026, %v890, 0
        %v2136 = vsel %vm2026, %v891, 0
        %v2139 = vsel %vm2026, %v892, 0
        %v2142 = vsel %vm2026, %v893, 0
        %v2145 = vsel %vm2026, %v894, 0
        %v2148 = vsel %vm2026, %v895, 0
        %v2151 = vsel %vm2026, %v896, 0
        %v2154 = vsel %vm2026, %v897, 0
        %v2157 = vsel %vm2026, %v898, 0
        %v2160 = vsel %vm2026, %v899, 0
        %v2163 = vsel %vm2026, %v900, 0
        %v2166 = vsel %vm2026, %v901, 0
        %v2169 = vsel %vm2026, %v902, 0
        %v2172 = vsel %vm2026, %v903, 0
        %v2175 = vsel %vm2026, %v904, 0
        %v2178 = vsel %vm2026, %v905, 0
        %v2181 = vsel %vm2026, %v906, 0
        %v2184 = vsel %vm2026, %v907, 0
        %v2187 = vsel %vm2026, %v908, 0
        %v2190 = vsel %vm2026, %v909, 0
        %v2193 = vsel %vm2026, %v910, 0
        %v2196 = vsel %vm2026, %v911, 0
        %v2199 = vsel %vm2026, %v912, 0
        %v2202 = vsel %vm2026, %v913, 0
        %v2205 = vsel %vm2026, %v914, 0
        %v2208 = vsel %vm2026, %v915, 0
        %v2211 = vsel %vm2026, %v916, 0
        %v2214 = vsel %vm2026, %v917, 0
        %v2217 = vsel %vm2026, %v918, 0
        %2219 = vmatprep.subr.mxu0 0.0
        %2220 = vmatpush1.msra.mxu0 %v1443
        %2221 = vmatprep.subr.mxu0 0.0
        %2222 = vmatpush1.msra.mxu0 %v1444
        %2223 = vmatprep.subr.mxu0 0.0
        %2224 = vmatpush1.msra.mxu0 %v1445
        %2225 = vmatprep.subr.mxu0 0.0
        %2226 = vmatpush1.msra.mxu0 %v1446
        %2227 = vmatprep.subr.mxu0 0.0
        %2228 = vmatpush1.msra.mxu0 0.0
        %2229 = vmatprep.subr.mxu0 0.0
        %2230 = vmatpush1.msra.mxu0 0.0
        %2231 = vmatprep.subr.mxu0 0.0
        %2232 = vmatpush1.msra.mxu0 0.0
        %2233 = vmatprep.subr.mxu0 0.0
        %2234 = vmatpush1.msra.mxu0 0.0
        %2235 = vmatprep.subr.mxu0 0.0
        %2236 = vmatpush1.msra.mxu0 0.0
        %2237 = vmatprep.subr.mxu0 0.0
        %2238 = vmatpush1.msra.mxu0 0.0
        %2239 = vmatprep.subr.mxu0 0.0
        %2240 = vmatpush1.msra.mxu0 0.0
        %2241 = vmatprep.subr.mxu0 0.0
        %2242 = vmatpush1.msra.mxu0 0.0
        %2243 = vmatprep.subr.mxu0 0.0
        %2244 = vmatpush1.msra.mxu0 0.0
        %2245 = vmatprep.subr.mxu0 0.0
        %2246 = vmatpush1.msra.mxu0 0.0
        %2247 = vmatprep.subr.mxu0 0.0
        %2248 = vmatpush1.msra.mxu0 0.0
        %2249 = vmatprep.subr.mxu0 0.0
        %2250 = vmatpush1.msra.mxu0 0.0
        %2251 = vmatprep.subr.mxu0 0.0
        %2252 = vmatpush1.msra.mxu0 0.0
        %2253 = vmatprep.subr.mxu0 0.0
        %2254 = vmatpush1.msra.mxu0 0.0
        %2255 = vmatprep.subr.mxu0 0.0
        %2256 = vmatpush1.msra.mxu0 0.0
        %2257 = vmatprep.subr.mxu0 0.0
        %2258 = vmatpush1.msra.mxu0 0.0
        %2259 = vmatprep.subr.mxu0 0.0
        %2260 = vmatpush1.msra.mxu0 0.0
        %2261 = vmatprep.subr.mxu0 0.0
        %2262 = vmatpush1.msra.mxu0 0.0
        %2263 = vmatprep.subr.mxu0 0.0
        %2264 = vmatpush1.msra.mxu0 0.0
        %2265 = vmatprep.subr.mxu0 0.0
        %2266 = vmatpush1.msra.mxu0 0.0
        %2267 = vmatprep.subr.mxu0 0.0
        %2268 = vmatpush1.msra.mxu0 0.0
        %2269 = vmatprep.subr.mxu0 0.0
        %2270 = vmatpush1.msra.mxu0 0.0
        %2271 = vmatprep.subr.mxu0 0.0
        %2272 = vmatpush1.msra.mxu0 0.0
        %2273 = vmatprep.subr.mxu0 0.0
        %2274 = vmatpush1.msra.mxu0 0.0
        %2275 = vmatprep.subr.mxu0 0.0
        %2276 = vmatpush1.msra.mxu0 0.0
        %2277 = vmatprep.subr.mxu0 0.0
        %2278 = vmatpush1.msra.mxu0 0.0
        %2279 = vmatprep.subr.mxu0 0.0
        %2280 = vmatpush1.msra.mxu0 0.0
        %2281 = vmatprep.subr.mxu0 0.0
        %2282 = vmatpush1.msra.mxu0 0.0
        %2283 = vmatprep.mubr.f32.mxu0 0.0
        %2284 = vmatmul.mubr.f32.gmra.mrb[0].mxu0 %v2028
        %v2285 = vpop.f32.mrb[0].mxu0
        %v2286 = vadd.f32 %v1708, %v2285
        %v2287 = vpop.f32.mrb[0].mxu0
        %2288 = vmatprep.mubr.f32.mxu0 0.0
        %2289 = vmatmul.mubr.f32.gmra.mrb[0].mxu0 %v2031
        %v2290 = vpop.f32.mrb[0].mxu0
        %v2291 = vadd.f32 %v1713, %v2290
        %v2292 = vpop.f32.mrb[0].mxu0
        %2293 = vmatprep.mubr.f32.mxu0 0.0
        %2294 = vmatmul.mubr.f32.gmra.mrb[0].mxu0 %v2034
        %v2295 = vpop.f32.mrb[0].mxu0
        %v2296 = vadd.f32 %v1718, %v2295
        %v2297 = vpop.f32.mrb[0].mxu0
        %2298 = vmatprep.mubr.f32.mxu0 0.0
        %2299 = vmatmul.mubr.f32.gmra.mrb[0].mxu0 %v2037
        %v2300 = vpop.f32.mrb[0].mxu0
        %v2301 = vadd.f32 %v1723, %v2300
        %v2302 = vpop.f32.mrb[0].mxu0
        %2303 = vmatprep.mubr.f32.mxu0 0.0
        %2304 = vmatmul.mubr.f32.gmra.mrb[0].mxu0 %v2040
        %v2305 = vpop.f32.mrb[0].mxu0
        %v2306 = vadd.f32 %v1728, %v2305
        %v2307 = vpop.f32.mrb[0].mxu0
        %2308 = vmatprep.mubr.f32.mxu0 0.0
        %2309 = vmatmul.mubr.f32.gmra.mrb[0].mxu0 %v2043
        %v2310 = vpop.f32.mrb[0].mxu0
        %v2311 = vadd.f32 %v1733, %v2310
        %v2312 = vpop.f32.mrb[0].mxu0
        %2313 = vmatprep.mubr.f32.mxu0 0.0
        %2314 = vmatmul.mubr.f32.gmra.mrb[0].mxu0 %v2046
        %v2315 = vpop.f32.mrb[0].mxu0
        %v2316 = vadd.f32 %v1738, %v2315
        %v2317 = vpop.f32.mrb[0].mxu0
        %2318 = vmatprep.mubr.f32.mxu0 0.0
        %2319 = vmatmul.mubr.f32.gmra.mrb[0].mxu0 %v2049
        %v2320 = vpop.f32.mrb[0].mxu0
        %v2321 = vadd.f32 %v1743, %v2320
        %v2322 = vpop.f32.mrb[0].mxu0
        %2323 = vmatprep.mubr.f32.mxu0 0.0
        %2324 = vmatmul.mubr.f32.gmra.mrb[0].mxu0 %v2052
        %v2325 = vpop.f32.mrb[0].mxu0
        %v2326 = vadd.f32 %v1748, %v2325
        %v2327 = vpop.f32.mrb[0].mxu0
        %2328 = vmatprep.mubr.f32.mxu0 0.0
        %2329 = vmatmul.mubr.f32.gmra.mrb[0].mxu0 %v2055
        %v2330 = vpop.f32.mrb[0].mxu0
        %v2331 = vadd.f32 %v1753, %v2330
        %v2332 = vpop.f32.mrb[0].mxu0
        %2333 = vmatprep.mubr.f32.mxu0 0.0
        %2334 = vmatmul.mubr.f32.gmra.mrb[0].mxu0 %v2058
        %v2335 = vpop.f32.mrb[0].mxu0
        %v2336 = vadd.f32 %v1758, %v2335
        %v2337 = vpop.f32.mrb[0].mxu0
        %2338 = vmatprep.mubr.f32.mxu0 0.0
        %2339 = vmatmul.mubr.f32.gmra.mrb[0].mxu0 %v2061
        %v2340 = vpop.f32.mrb[0].mxu0
        %v2341 = vadd.f32 %v1763, %v2340
        %v2342 = vpop.f32.mrb[0].mxu0
        %2343 = vmatprep.mubr.f32.mxu0 0.0
        %2344 = vmatmul.mubr.f32.gmra.mrb[0].mxu0 %v2064
        %v2345 = vpop.f32.mrb[0].mxu0
        %v2346 = vadd.f32 %v1768, %v2345
        %v2347 = vpop.f32.mrb[0].mxu0
        %2348 = vmatprep.mubr.f32.mxu0 0.0
        %2349 = vmatmul.mubr.f32.gmra.mrb[0].mxu0 %v2067
        %v2350 = vpop.f32.mrb[0].mxu0
        %v2351 = vadd.f32 %v1773, %v2350
        %v2352 = vpop.f32.mrb[0].mxu0
        %2353 = vmatprep.mubr.f32.mxu0 0.0
        %2354 = vmatmul.mubr.f32.gmra.mrb[0].mxu0 %v2070
        %v2355 = vpop.f32.mrb[0].mxu0
        %v2356 = vadd.f32 %v1778, %v2355
        %v2357 = vpop.f32.mrb[0].mxu0
        %2358 = vmatprep.mubr.f32.mxu0 0.0
        %2359 = vmatmul.mubr.f32.gmra.mrb[0].mxu0 %v2073
        %v2360 = vpop.f32.mrb[0].mxu0
        %v2361 = vadd.f32 %v1783, %v2360
        %v2362 = vpop.f32.mrb[0].mxu0
        %2363 = vmatprep.mubr.f32.mxu0 0.0
        %2364 = vmatmul.mubr.f32.gmra.mrb[0].mxu0 %v2076
        %v2365 = vpop.f32.mrb[0].mxu0
        %v2366 = vadd.f32 %v1788, %v2365
        %v2367 = vpop.f32.mrb[0].mxu0
        %2368 = vmatprep.mubr.f32.mxu0 0.0
        %2369 = vmatmul.mubr.f32.gmra.mrb[0].mxu0 %v2079
        %v2370 = vpop.f32.mrb[0].mxu0
        %v2371 = vadd.f32 %v1793, %v2370
        %v2372 = vpop.f32.mrb[0].mxu0
        %2373 = vmatprep.mubr.f32.mxu0 0.0
        %2374 = vmatmul.mubr.f32.gmra.mrb[0].mxu0 %v2082
        %v2375 = vpop.f32.mrb[0].mxu0
        %v2376 = vadd.f32 %v1798, %v2375
        %v2377 = vpop.f32.mrb[0].mxu0
        %2378 = vmatprep.mubr.f32.mxu0 0.0
        %2379 = vmatmul.mubr.f32.gmra.mrb[0].mxu0 %v2085
        %v2380 = vpop.f32.mrb[0].mxu0
        %v2381 = vadd.f32 %v1803, %v2380
        %v2382 = vpop.f32.mrb[0].mxu0
        %2383 = vmatprep.mubr.f32.mxu0 0.0
        %2384 = vmatmul.mubr.f32.gmra.mrb[0].mxu0 %v2088
        %v2385 = vpop.f32.mrb[0].mxu0
        %v2386 = vadd.f32 %v1808, %v2385
        %v2387 = vpop.f32.mrb[0].mxu0
        %2388 = vmatprep.mubr.f32.mxu0 0.0
        %2389 = vmatmul.mubr.f32.gmra.mrb[0].mxu0 %v2091
        %v2390 = vpop.f32.mrb[0].mxu0
        %v2391 = vadd.f32 %v1813, %v2390
        %v2392 = vpop.f32.mrb[0].mxu0
        %2393 = vmatprep.mubr.f32.mxu0 0.0
        %2394 = vmatmul.mubr.f32.gmra.mrb[0].mxu0 %v2094
        %v2395 = vpop.f32.mrb[0].mxu0
        %v2396 = vadd.f32 %v1818, %v2395
        %v2397 = vpop.f32.mrb[0].mxu0
        %2398 = vmatprep.mubr.f32.mxu0 0.0
        %2399 = vmatmul.mubr.f32.gmra.mrb[0].mxu0 %v2097
        %v2400 = vpop.f32.mrb[0].mxu0
        %v2401 = vadd.f32 %v1823, %v2400
        %v2402 = vpop.f32.mrb[0].mxu0
        %2403 = vmatprep.mubr.f32.mxu0 0.0
        %2404 = vmatmul.mubr.f32.gmra.mrb[0].mxu0 %v2100
        %v2405 = vpop.f32.mrb[0].mxu0
        %v2406 = vadd.f32 %v1828, %v2405
        %v2407 = vpop.f32.mrb[0].mxu0
        %2408 = vmatprep.mubr.f32.mxu0 0.0
        %2409 = vmatmul.mubr.f32.gmra.mrb[0].mxu0 %v2103
        %v2410 = vpop.f32.mrb[0].mxu0
        %v2411 = vadd.f32 %v1833, %v2410
        %v2412 = vpop.f32.mrb[0].mxu0
        %2413 = vmatprep.mubr.f32.mxu0 0.0
        %2414 = vmatmul.mubr.f32.gmra.mrb[0].mxu0 %v2106
        %v2415 = vpop.f32.mrb[0].mxu0
        %v2416 = vadd.f32 %v1838, %v2415
        %v2417 = vpop.f32.mrb[0].mxu0
        %2418 = vmatprep.mubr.f32.mxu0 0.0
        %2419 = vmatmul.mubr.f32.gmra.mrb[0].mxu0 %v2109
        %v2420 = vpop.f32.mrb[0].mxu0
        %v2421 = vadd.f32 %v1843, %v2420
        %v2422 = vpop.f32.mrb[0].mxu0
        %2423 = vmatprep.mubr.f32.mxu0 0.0
        %2424 = vmatmul.mubr.f32.gmra.mrb[0].mxu0 %v2112
        %v2425 = vpop.f32.mrb[0].mxu0
        %v2426 = vadd.f32 %v1848, %v2425
        %v2427 = vpop.f32.mrb[0].mxu0
        %2428 = vmatprep.mubr.f32.mxu0 0.0
        %2429 = vmatmul.mubr.f32.gmra.mrb[0].mxu0 %v2115
        %v2430 = vpop.f32.mrb[0].mxu0
        %v2431 = vadd.f32 %v1853, %v2430
        %v2432 = vpop.f32.mrb[0].mxu0
        %2433 = vmatprep.mubr.f32.mxu0 0.0
        %2434 = vmatmul.mubr.f32.gmra.mrb[0].mxu0 %v2118
        %v2435 = vpop.f32.mrb[0].mxu0
        %v2436 = vadd.f32 %v1858, %v2435
        %v2437 = vpop.f32.mrb[0].mxu0
        %2438 = vmatprep.mubr.f32.mxu0 0.0
        %2439 = vmatmul.mubr.f32.gmra.mrb[0].mxu0 %v2121
        %v2440 = vpop.f32.mrb[0].mxu0
        %v2441 = vadd.f32 %v1863, %v2440
        %v2442 = vpop.f32.mrb[0].mxu0
        %2443 = vmatprep.mubr.f32.mxu0 0.0
        %2444 = vmatmul.mubr.f32.gmra.mrb[0].mxu0 %v2124
        %v2445 = vpop.f32.mrb[0].mxu0
        %v2446 = vadd.f32 %v1868, %v2445
        %v2447 = vpop.f32.mrb[0].mxu0
        %2448 = vmatprep.mubr.f32.mxu0 0.0
        %2449 = vmatmul.mubr.f32.gmra.mrb[0].mxu0 %v2127
        %v2450 = vpop.f32.mrb[0].mxu0
        %v2451 = vadd.f32 %v1873, %v2450
        %v2452 = vpop.f32.mrb[0].mxu0
        %2453 = vmatprep.mubr.f32.mxu0 0.0
        %2454 = vmatmul.mubr.f32.gmra.mrb[0].mxu0 %v2130
        %v2455 = vpop.f32.mrb[0].mxu0
        %v2456 = vadd.f32 %v1878, %v2455
        %v2457 = vpop.f32.mrb[0].mxu0
        %2458 = vmatprep.mubr.f32.mxu0 0.0
        %2459 = vmatmul.mubr.f32.gmra.mrb[0].mxu0 %v2133
        %v2460 = vpop.f32.mrb[0].mxu0
        %v2461 = vadd.f32 %v1883, %v2460
        %v2462 = vpop.f32.mrb[0].mxu0
        %2463 = vmatprep.mubr.f32.mxu0 0.0
        %2464 = vmatmul.mubr.f32.gmra.mrb[0].mxu0 %v2136
        %v2465 = vpop.f32.mrb[0].mxu0
        %v2466 = vadd.f32 %v1888, %v2465
        %v2467 = vpop.f32.mrb[0].mxu0
        %2468 = vmatprep.mubr.f32.mxu0 0.0
        %2469 = vmatmul.mubr.f32.gmra.mrb[0].mxu0 %v2139
        %v2470 = vpop.f32.mrb[0].mxu0
        %v2471 = vadd.f32 %v1893, %v2470
        %v2472 = vpop.f32.mrb[0].mxu0
        %2473 = vmatprep.mubr.f32.mxu0 0.0
        %2474 = vmatmul.mubr.f32.gmra.mrb[0].mxu0 %v2142
        %v2475 = vpop.f32.mrb[0].mxu0
        %v2476 = vadd.f32 %v1898, %v2475
        %v2477 = vpop.f32.mrb[0].mxu0
        %2478 = vmatprep.mubr.f32.mxu0 0.0
        %2479 = vmatmul.mubr.f32.gmra.mrb[0].mxu0 %v2145
        %v2480 = vpop.f32.mrb[0].mxu0
        %v2481 = vadd.f32 %v1903, %v2480
        %v2482 = vpop.f32.mrb[0].mxu0
        %2483 = vmatprep.mubr.f32.mxu0 0.0
        %2484 = vmatmul.mubr.f32.gmra.mrb[0].mxu0 %v2148
        %v2485 = vpop.f32.mrb[0].mxu0
        %v2486 = vadd.f32 %v1908, %v2485
        %v2487 = vpop.f32.mrb[0].mxu0
        %2488 = vmatprep.mubr.f32.mxu0 0.0
        %2489 = vmatmul.mubr.f32.gmra.mrb[0].mxu0 %v2151
        %v2490 = vpop.f32.mrb[0].mxu0
        %v2491 = vadd.f32 %v1913, %v2490
        %v2492 = vpop.f32.mrb[0].mxu0
        %2493 = vmatprep.mubr.f32.mxu0 0.0
        %2494 = vmatmul.mubr.f32.gmra.mrb[0].mxu0 %v2154
        %v2495 = vpop.f32.mrb[0].mxu0
        %v2496 = vadd.f32 %v1918, %v2495
        %v2497 = vpop.f32.mrb[0].mxu0
        %2498 = vmatprep.mubr.f32.mxu0 0.0
        %2499 = vmatmul.mubr.f32.gmra.mrb[0].mxu0 %v2157
        %v2500 = vpop.f32.mrb[0].mxu0
        %v2501 = vadd.f32 %v1923, %v2500
        %v2502 = vpop.f32.mrb[0].mxu0
        %2503 = vmatprep.mubr.f32.mxu0 0.0
        %2504 = vmatmul.mubr.f32.gmra.mrb[0].mxu0 %v2160
        %v2505 = vpop.f32.mrb[0].mxu0
        %v2506 = vadd.f32 %v1928, %v2505
        %v2507 = vpop.f32.mrb[0].mxu0
        %2508 = vmatprep.mubr.f32.mxu0 0.0
        %2509 = vmatmul.mubr.f32.gmra.mrb[0].mxu0 %v2163
        %v2510 = vpop.f32.mrb[0].mxu0
        %v2511 = vadd.f32 %v1933, %v2510
        %v2512 = vpop.f32.mrb[0].mxu0
        %2513 = vmatprep.mubr.f32.mxu0 0.0
        %2514 = vmatmul.mubr.f32.gmra.mrb[0].mxu0 %v2166
        %v2515 = vpop.f32.mrb[0].mxu0
        %v2516 = vadd.f32 %v1938, %v2515
        %v2517 = vpop.f32.mrb[0].mxu0
        %2518 = vmatprep.mubr.f32.mxu0 0.0
        %2519 = vmatmul.mubr.f32.gmra.mrb[0].mxu0 %v2169
        %v2520 = vpop.f32.mrb[0].mxu0
        %v2521 = vadd.f32 %v1943, %v2520
        %v2522 = vpop.f32.mrb[0].mxu0
        %2523 = vmatprep.mubr.f32.mxu0 0.0
        %2524 = vmatmul.mubr.f32.gmra.mrb[0].mxu0 %v2172
        %v2525 = vpop.f32.mrb[0].mxu0
        %v2526 = vadd.f32 %v1948, %v2525
        %v2527 = vpop.f32.mrb[0].mxu0
        %2528 = vmatprep.mubr.f32.mxu0 0.0
        %2529 = vmatmul.mubr.f32.gmra.mrb[0].mxu0 %v2175
        %v2530 = vpop.f32.mrb[0].mxu0
        %v2531 = vadd.f32 %v1953, %v2530
        %v2532 = vpop.f32.mrb[0].mxu0
        %2533 = vmatprep.mubr.f32.mxu0 0.0
        %2534 = vmatmul.mubr.f32.gmra.mrb[0].mxu0 %v2178
        %v2535 = vpop.f32.mrb[0].mxu0
        %v2536 = vadd.f32 %v1958, %v2535
        %v2537 = vpop.f32.mrb[0].mxu0
        %2538 = vmatprep.mubr.f32.mxu0 0.0
        %2539 = vmatmul.mubr.f32.gmra.mrb[0].mxu0 %v2181
        %v2540 = vpop.f32.mrb[0].mxu0
        %v2541 = vadd.f32 %v1963, %v2540
        %v2542 = vpop.f32.mrb[0].mxu0
        %2543 = vmatprep.mubr.f32.mxu0 0.0
        %2544 = vmatmul.mubr.f32.gmra.mrb[0].mxu0 %v2184
        %v2545 = vpop.f32.mrb[0].mxu0
        %v2546 = vadd.f32 %v1968, %v2545
        %v2547 = vpop.f32.mrb[0].mxu0
        %2548 = vmatprep.mubr.f32.mxu0 0.0
        %2549 = vmatmul.mubr.f32.gmra.mrb[0].mxu0 %v2187
        %v2550 = vpop.f32.mrb[0].mxu0
        %v2551 = vadd.f32 %v1973, %v2550
        %v2552 = vpop.f32.mrb[0].mxu0
        %2553 = vmatprep.mubr.f32.mxu0 0.0
        %2554 = vmatmul.mubr.f32.gmra.mrb[0].mxu0 %v2190
        %v2555 = vpop.f32.mrb[0].mxu0
        %v2556 = vadd.f32 %v1978, %v2555
        %v2557 = vpop.f32.mrb[0].mxu0
        %2558 = vmatprep.mubr.f32.mxu0 0.0
        %2559 = vmatmul.mubr.f32.gmra.mrb[0].mxu0 %v2193
        %v2560 = vpop.f32.mrb[0].mxu0
        %v2561 = vadd.f32 %v1983, %v2560
        %v2562 = vpop.f32.mrb[0].mxu0
        %2563 = vmatprep.mubr.f32.mxu0 0.0
        %2564 = vmatmul.mubr.f32.gmra.mrb[0].mxu0 %v2196
        %v2565 = vpop.f32.mrb[0].mxu0
        %v2566 = vadd.f32 %v1988, %v2565
        %v2567 = vpop.f32.mrb[0].mxu0
        %2568 = vmatprep.mubr.f32.mxu0 0.0
        %2569 = vmatmul.mubr.f32.gmra.mrb[0].mxu0 %v2199
        %v2570 = vpop.f32.mrb[0].mxu0
        %v2571 = vadd.f32 %v1993, %v2570
        %v2572 = vpop.f32.mrb[0].mxu0
        %2573 = vmatprep.mubr.f32.mxu0 0.0
        %2574 = vmatmul.mubr.f32.gmra.mrb[0].mxu0 %v2202
        %v2575 = vpop.f32.mrb[0].mxu0
        %v2576 = vadd.f32 %v1998, %v2575
        %v2577 = vpop.f32.mrb[0].mxu0
        %2578 = vmatprep.mubr.f32.mxu0 0.0
        %2579 = vmatmul.mubr.f32.gmra.mrb[0].mxu0 %v2205
        %v2580 = vpop.f32.mrb[0].mxu0
        %v2581 = vadd.f32 %v2003, %v2580
        %v2582 = vpop.f32.mrb[0].mxu0
        %2583 = vmatprep.mubr.f32.mxu0 0.0
        %2584 = vmatmul.mubr.f32.gmra.mrb[0].mxu0 %v2208
        %v2585 = vpop.f32.mrb[0].mxu0
        %v2586 = vadd.f32 %v2008, %v2585
        %v2587 = vpop.f32.mrb[0].mxu0
        %2588 = vmatprep.mubr.f32.mxu0 0.0
        %2589 = vmatmul.mubr.f32.gmra.mrb[0].mxu0 %v2211
        %v2590 = vpop.f32.mrb[0].mxu0
        %v2591 = vadd.f32 %v2013, %v2590
        %v2592 = vpop.f32.mrb[0].mxu0
        %2593 = vmatprep.mubr.f32.mxu0 0.0
        %2594 = vmatmul.mubr.f32.gmra.mrb[0].mxu0 %v2214
        %v2595 = vpop.f32.mrb[0].mxu0
        %v2596 = vadd.f32 %v2018, %v2595
        %v2597 = vpop.f32.mrb[0].mxu0
        %2598 = vmatprep.mubr.f32.mxu0 0.0
        %2599 = vmatmul.mubr.f32.gmra.mrb[0].mxu0 %v2217
        %v2600 = vpop.f32.mrb[0].mxu0
        %v2601 = vadd.f32 %v2023, %v2600
        %v2602 = vpop.f32.mrb[0].mxu0
        %2603 = vdwg.mxu0
        %v2604 = vld [vmem:[%s7] sm:$0x1]
        %v2606 = vlaneseq
        %v2607 = vshrl.u32 %v2606, 7
        %v2608 = vsub.s32 0, %v2607
        %v2609 = vrot.slane %v2604, %v2608
        %v2611 = vadd.f32 %v2286, %v2609
        %v2612 = vadd.f32 %v2291, %v2609
        %v2613 = vadd.f32 %v2296, %v2609
        %v2614 = vadd.f32 %v2301, %v2609
        %v2615 = vadd.f32 %v2306, %v2609
        %v2616 = vadd.f32 %v2311, %v2609
        %v2617 = vadd.f32 %v2316, %v2609
        %v2618 = vadd.f32 %v2321, %v2609
        %v2619 = vadd.f32 %v2326, %v2609
        %v2620 = vadd.f32 %v2331, %v2609
        %v2621 = vadd.f32 %v2336, %v2609
        %v2622 = vadd.f32 %v2341, %v2609
        %v2623 = vadd.f32 %v2346, %v2609
        %v2624 = vadd.f32 %v2351, %v2609
        %v2625 = vadd.f32 %v2356, %v2609
        %v2626 = vadd.f32 %v2361, %v2609
        %v2627 = vadd.f32 %v2366, %v2609
        %v2628 = vadd.f32 %v2371, %v2609
        %v2629 = vadd.f32 %v2376, %v2609
        %v2630 = vadd.f32 %v2381, %v2609
        %v2631 = vadd.f32 %v2386, %v2609
        %v2632 = vadd.f32 %v2391, %v2609
        %v2633 = vadd.f32 %v2396, %v2609
        %v2634 = vadd.f32 %v2401, %v2609
        %v2635 = vadd.f32 %v2406, %v2609
        %v2636 = vadd.f32 %v2411, %v2609
        %v2637 = vadd.f32 %v2416, %v2609
        %v2638 = vadd.f32 %v2421, %v2609
        %v2639 = vadd.f32 %v2426, %v2609
        %v2640 = vadd.f32 %v2431, %v2609
        %v2641 = vadd.f32 %v2436, %v2609
        %v2642 = vadd.f32 %v2441, %v2609
        %v2643 = vadd.f32 %v2446, %v2609
        %v2644 = vadd.f32 %v2451, %v2609
        %v2645 = vadd.f32 %v2456, %v2609
        %v2646 = vadd.f32 %v2461, %v2609
        %v2647 = vadd.f32 %v2466, %v2609
        %v2648 = vadd.f32 %v2471, %v2609
        %v2649 = vadd.f32 %v2476, %v2609
        %v2650 = vadd.f32 %v2481, %v2609
        %v2651 = vadd.f32 %v2486, %v2609
        %v2652 = vadd.f32 %v2491, %v2609
        %v2653 = vadd.f32 %v2496, %v2609
        %v2654 = vadd.f32 %v2501, %v2609
        %v2655 = vadd.f32 %v2506, %v2609
        %v2656 = vadd.f32 %v2511, %v2609
        %v2657 = vadd.f32 %v2516, %v2609
        %v2658 = vadd.f32 %v2521, %v2609
        %v2659 = vadd.f32 %v2526, %v2609
        %v2660 = vadd.f32 %v2531, %v2609
        %v2661 = vadd.f32 %v2536, %v2609
        %v2662 = vadd.f32 %v2541, %v2609
        %v2663 = vadd.f32 %v2546, %v2609
        %v2664 = vadd.f32 %v2551, %v2609
        %v2665 = vadd.f32 %v2556, %v2609
        %v2666 = vadd.f32 %v2561, %v2609
        %v2667 = vadd.f32 %v2566, %v2609
        %v2668 = vadd.f32 %v2571, %v2609
        %v2669 = vadd.f32 %v2576, %v2609
        %v2670 = vadd.f32 %v2581, %v2609
        %v2671 = vadd.f32 %v2586, %v2609
        %v2672 = vadd.f32 %v2591, %v2609
        %v2673 = vadd.f32 %v2596, %v2609
        %v2674 = vadd.f32 %v2601, %v2609
        %v2675 = vmax.f32 %v2611, 0.0
        %v2676 = vmax.f32 %v2612, 0.0
        %v2677 = vmax.f32 %v2613, 0.0
        %v2678 = vmax.f32 %v2614, 0.0
        %v2679 = vmax.f32 %v2615, 0.0
        %v2680 = vmax.f32 %v2616, 0.0
        %v2681 = vmax.f32 %v2617, 0.0
        %v2682 = vmax.f32 %v2618, 0.0
        %v2683 = vmax.f32 %v2619, 0.0
        %v2684 = vmax.f32 %v2620, 0.0
        %v2685 = vmax.f32 %v2621, 0.0
        %v2686 = vmax.f32 %v2622, 0.0
        %v2687 = vmax.f32 %v2623, 0.0
        %v2688 = vmax.f32 %v2624, 0.0
        %v2689 = vmax.f32 %v2625, 0.0
        %v2690 = vmax.f32 %v2626, 0.0
        %v2691 = vmax.f32 %v2627, 0.0
        %v2692 = vmax.f32 %v2628, 0.0
        %v2693 = vmax.f32 %v2629, 0.0
        %v2694 = vmax.f32 %v2630, 0.0
        %v2695 = vmax.f32 %v2631, 0.0
        %v2696 = vmax.f32 %v2632, 0.0
        %v2697 = vmax.f32 %v2633, 0.0
        %v2698 = vmax.f32 %v2634, 0.0
        %v2699 = vmax.f32 %v2635, 0.0
        %v2700 = vmax.f32 %v2636, 0.0
        %v2701 = vmax.f32 %v2637, 0.0
        %v2702 = vmax.f32 %v2638, 0.0
        %v2703 = vmax.f32 %v2639, 0.0
        %v2704 = vmax.f32 %v2640, 0.0
        %v2705 = vmax.f32 %v2641, 0.0
        %v2706 = vmax.f32 %v2642, 0.0
        %v2707 = vmax.f32 %v2643, 0.0
        %v2708 = vmax.f32 %v2644, 0.0
        %v2709 = vmax.f32 %v2645, 0.0
        %v2710 = vmax.f32 %v2646, 0.0
        %v2711 = vmax.f32 %v2647, 0.0
        %v2712 = vmax.f32 %v2648, 0.0
        %v2713 = vmax.f32 %v2649, 0.0
        %v2714 = vmax.f32 %v2650, 0.0
        %v2715 = vmax.f32 %v2651, 0.0
        %v2716 = vmax.f32 %v2652, 0.0
        %v2717 = vmax.f32 %v2653, 0.0
        %v2718 = vmax.f32 %v2654, 0.0
        %v2719 = vmax.f32 %v2655, 0.0
        %v2720 = vmax.f32 %v2656, 0.0
        %v2721 = vmax.f32 %v2657, 0.0
        %v2722 = vmax.f32 %v2658, 0.0
        %v2723 = vmax.f32 %v2659, 0.0
        %v2724 = vmax.f32 %v2660, 0.0
        %v2725 = vmax.f32 %v2661, 0.0
        %v2726 = vmax.f32 %v2662, 0.0
        %v2727 = vmax.f32 %v2663, 0.0
        %v2728 = vmax.f32 %v2664, 0.0
        %v2729 = vmax.f32 %v2665, 0.0
        %v2730 = vmax.f32 %v2666, 0.0
        %v2731 = vmax.f32 %v2667, 0.0
        %v2732 = vmax.f32 %v2668, 0.0
        %v2733 = vmax.f32 %v2669, 0.0
        %v2734 = vmax.f32 %v2670, 0.0
        %v2735 = vmax.f32 %v2671, 0.0
        %v2736 = vmax.f32 %v2672, 0.0
        %v2737 = vmax.f32 %v2673, 0.0
        %v2738 = vmax.f32 %v2674, 0.0
        %2739 = vst.msk [vmem:[%s344] sm:$0xff] %vm2026, %v2675
        %2740 = vst.msk [vmem:[%s344 + $0x8] sm:$0xff] %vm2026, %v2676
        %2741 = vst.msk [vmem:[%s344 + $0x10] sm:$0xff] %vm2026, %v2677
        %2742 = vst.msk [vmem:[%s344 + $0x18] sm:$0xff] %vm2026, %v2678
        %2743 = vst.msk [vmem:[%s344 + $0x20] sm:$0xff] %vm2026, %v2679
        %2744 = vst.msk [vmem:[%s344 + $0x28] sm:$0xff] %vm2026, %v2680
        %2745 = vst.msk [vmem:[%s344 + $0x30] sm:$0xff] %vm2026, %v2681
        %2746 = vst.msk [vmem:[%s344 + $0x38] sm:$0xff] %vm2026, %v2682
        %2747 = vst.msk [vmem:[%s344 + $0x40] sm:$0xff] %vm2026, %v2683
        %2748 = vst.msk [vmem:[%s344 + $0x48] sm:$0xff] %vm2026, %v2684
        %2749 = vst.msk [vmem:[%s344 + $0x50] sm:$0xff] %vm2026, %v2685
        %2750 = vst.msk [vmem:[%s344 + $0x58] sm:$0xff] %vm2026, %v2686
        %2751 = vst.msk [vmem:[%s344 + $0x60] sm:$0xff] %vm2026, %v2687
        %2752 = vst.msk [vmem:[%s344 + $0x68] sm:$0xff] %vm2026, %v2688
        %2753 = vst.msk [vmem:[%s344 + $0x70] sm:$0xff] %vm2026, %v2689
        %2754 = vst.msk [vmem:[%s344 + $0x78] sm:$0xff] %vm2026, %v2690
        %2755 = vst.msk [vmem:[%s344 + $0x80] sm:$0xff] %vm2026, %v2691
        %2756 = vst.msk [vmem:[%s344 + $0x88] sm:$0xff] %vm2026, %v2692
        %2757 = vst.msk [vmem:[%s344 + $0x90] sm:$0xff] %vm2026, %v2693
        %2758 = vst.msk [vmem:[%s344 + $0x98] sm:$0xff] %vm2026, %v2694
        %2759 = vst.msk [vmem:[%s344 + $0xa0] sm:$0xff] %vm2026, %v2695
        %2760 = vst.msk [vmem:[%s344 + $0xa8] sm:$0xff] %vm2026, %v2696
        %2761 = vst.msk [vmem:[%s344 + $0xb0] sm:$0xff] %vm2026, %v2697
        %2762 = vst.msk [vmem:[%s344 + $0xb8] sm:$0xff] %vm2026, %v2698
        %2763 = vst.msk [vmem:[%s344 + $0xc0] sm:$0xff] %vm2026, %v2699
        %2764 = vst.msk [vmem:[%s344 + $0xc8] sm:$0xff] %vm2026, %v2700
        %2765 = vst.msk [vmem:[%s344 + $0xd0] sm:$0xff] %vm2026, %v2701
        %2766 = vst.msk [vmem:[%s344 + $0xd8] sm:$0xff] %vm2026, %v2702
        %2767 = vst.msk [vmem:[%s344 + $0xe0] sm:$0xff] %vm2026, %v2703
        %2768 = vst.msk [vmem:[%s344 + $0xe8] sm:$0xff] %vm2026, %v2704
        %2769 = vst.msk [vmem:[%s344 + $0xf0] sm:$0xff] %vm2026, %v2705
        %2770 = vst.msk [vmem:[%s344 + $0xf8] sm:$0xff] %vm2026, %v2706
        %2771 = vst.msk [vmem:[%s344 + $0x100] sm:$0xff] %vm2026, %v2707
        %2772 = vst.msk [vmem:[%s344 + $0x108] sm:$0xff] %vm2026, %v2708
        %2773 = vst.msk [vmem:[%s344 + $0x110] sm:$0xff] %vm2026, %v2709
        %2774 = vst.msk [vmem:[%s344 + $0x118] sm:$0xff] %vm2026, %v2710
        %2775 = vst.msk [vmem:[%s344 + $0x120] sm:$0xff] %vm2026, %v2711
        %2776 = vst.msk [vmem:[%s344 + $0x128] sm:$0xff] %vm2026, %v2712
        %2777 = vst.msk [vmem:[%s344 + $0x130] sm:$0xff] %vm2026, %v2713
        %2778 = vst.msk [vmem:[%s344 + $0x138] sm:$0xff] %vm2026, %v2714
        %2779 = vst.msk [vmem:[%s344 + $0x140] sm:$0xff] %vm2026, %v2715
        %2780 = vst.msk [vmem:[%s344 + $0x148] sm:$0xff] %vm2026, %v2716
        %2781 = vst.msk [vmem:[%s344 + $0x150] sm:$0xff] %vm2026, %v2717
        %2782 = vst.msk [vmem:[%s344 + $0x158] sm:$0xff] %vm2026, %v2718
        %2783 = vst.msk [vmem:[%s344 + $0x160] sm:$0xff] %vm2026, %v2719
        %2784 = vst.msk [vmem:[%s344 + $0x168] sm:$0xff] %vm2026, %v2720
        %2785 = vst.msk [vmem:[%s344 + $0x170] sm:$0xff] %vm2026, %v2721
        %2786 = vst.msk [vmem:[%s344 + $0x178] sm:$0xff] %vm2026, %v2722
        %2787 = vst.msk [vmem:[%s344 + $0x180] sm:$0xff] %vm2026, %v2723
        %2788 = vst.msk [vmem:[%s344 + $0x188] sm:$0xff] %vm2026, %v2724
        %2789 = vst.msk [vmem:[%s344 + $0x190] sm:$0xff] %vm2026, %v2725
        %2790 = vst.msk [vmem:[%s344 + $0x198] sm:$0xff] %vm2026, %v2726
        %2791 = vst.msk [vmem:[%s344 + $0x1a0] sm:$0xff] %vm2026, %v2727
        %2792 = vst.msk [vmem:[%s344 + $0x1a8] sm:$0xff] %vm2026, %v2728
        %2793 = vst.msk [vmem:[%s344 + $0x1b0] sm:$0xff] %vm2026, %v2729
        %2794 = vst.msk [vmem:[%s344 + $0x1b8] sm:$0xff] %vm2026, %v2730
        %2795 = vst.msk [vmem:[%s344 + $0x1c0] sm:$0xff] %vm2026, %v2731
        %2796 = vst.msk [vmem:[%s344 + $0x1c8] sm:$0xff] %vm2026, %v2732
        %2797 = vst.msk [vmem:[%s344 + $0x1d0] sm:$0xff] %vm2026, %v2733
        %2798 = vst.msk [vmem:[%s344 + $0x1d8] sm:$0xff] %vm2026, %v2734
        %2799 = vst.msk [vmem:[%s344 + $0x1e0] sm:$0xff] %vm2026, %v2735
        %2800 = vst.msk [vmem:[%s344 + $0x1e8] sm:$0xff] %vm2026, %v2736
        %2801 = vst.msk [vmem:[%s344 + $0x1f0] sm:$0xff] %vm2026, %v2737
        %2802 = vst.msk [vmem:[%s344 + $0x1f8] sm:$0xff] %vm2026, %v2738
      $region68: #{tpu_custom_call.1} parent=51 // pred_fallthru
        _
      %s2803 = smul.u32 %s23, %s24
      %s2804 = smul.u32 64, %s2803
      %p2805 = scmp.lt.s32.totalorder %s2804, 127
      %s2806 = scalar_select %p2805, %s2804, 127
      %s2807 = smul.addr %s2806, 8
      %s2808 = scalar_lea.vmem %s8, %s2807
      // Predicated region
      $region69: #{tpu_custom_call.1} parent=51 // pred_check
        %p2809 = pneg %p230
      $region70: #{tpu_custom_call.1} parent=51 // pred_check_branch
        %2811 = sbr.rel (%p2809) target = $region72
      $region71: #{tpu_custom_call.1} parent=51 // pred_region
        %s2812 = smul.u32 %s23, %s24
        %s2813 = smul.u32 64, %s2812
      $region72: #{tpu_custom_call.1} parent=51 // pred_fallthru
        _
    $region52: #{tpu_custom_call.1} parent=5 // pred_fallthru
      _
    %p2814 = scmp.le.s32.totalorder 2, %s14
    // Predicated region
    $region73: #{tpu_custom_call.1} parent=5 // pred_check
      %p2815 = pneg %p2814
    $region74: #{tpu_custom_call.1} parent=5 // pred_check_branch
      %2817 = sbr.rel (%p2815) target = $region76
    $region75: #{tpu_custom_call.1} parent=5 // pred_region
      %s2818 = ssub.s32 %s14, 2
      // Predicated region
      $region77: #{tpu_custom_call.1} parent=75 // pred_check
        %p2819 = pneg %p236
      $region78: #{tpu_custom_call.1} parent=75 // pred_check_branch
        %2821 = sbr.rel (%p2819) target = $region80
      $region79: #{tpu_custom_call.1} parent=75 // pred_region
        %s2822 = smul.u32 %s25, %s26
        %s2823 = smul.u32 64, %s2822
        %p2824 = scmp.lt.s32.totalorder %s2823, 127
        %s2825 = scalar_select %p2824, %s2823, 127
        %s2826 = smul.addr %s2825, 8
        %s2827 = scalar_lea.vmem %s8, %s2826
      $region80: #{tpu_custom_call.1} parent=75 // pred_fallthru
        _
    $region76: #{tpu_custom_call.1} parent=5 // pred_fallthru
      _
  $region6: #{tpu_custom_call.1} parent=0 // loop_footer
    %s18 = sadd.s32 1, %s14
  $region7: #{tpu_custom_call.1} parent=0 // loop_footer_branch
    %13 = sbr.rel target = $region3
  $region8: #{tpu_custom_call.1} parent=0 // loop_exit
    _

</llo_original>
